<compile_context>
chip_gen: v5e
topology: v5e:2x2
jax: 0.10.0
libtpu: 0.0.40
codegen_flags: <defaults>
</compile_context>

<pallas_src>
import numpy as np

import jax
import jax.numpy as jnp
from jax.experimental import pallas as pl
from jax.experimental.pallas import tpu as pltpu


# ----------------------------------------------------------------------------
# Kernel
# ----------------------------------------------------------------------------
def _make_conv_block_kernel(n_layers, H, W, cout):
    """Fused n_layers x (3x3 conv + bias + ReLU), one batch element per grid step.

    Kernel refs (in order):
      x_ref                       : (1, H, W)            layer-1 input (Cin0=1)
      [wband_l, bias_l] * n_layers: (3, Kin_l, W*cout), (1, W*cout)
      o_ref                       : (1, H, W*cout)       lane-dense output
      buf0                        : (H+2, W+2)           padded layer-1 activation
      buf_a, buf_b                : (H+2, (W+2)*cout)    ping-pong padded activations

    Padded-buffer layout (lane-folded):
      buf[1+oh, ow*C + c] = act[oh, ow, c]; columns [W*C, (W+2)*C) and rows
      0, H+1 are always zero (the spatial zero padding). The banded weight
      matrices route out-of-image taps to the always-zero column region.
    """

    def kernel(*refs):
        x_ref = refs[0]
        layer_refs = refs[1:1 + 2 * n_layers]
        o_ref = refs[1 + 2 * n_layers]
        buf0, buf_a, buf_b = refs[2 + 2 * n_layers:]

        # In-kernel zero padding: zero the buffers once per grid step; only the
        # interior is overwritten below, so the pad rows/cols stay zero.
        buf0[...] = jnp.zeros_like(buf0)
        buf_a[...] = jnp.zeros_like(buf_a)
        buf_b[...] = jnp.zeros_like(buf_b)

        # Layer-1 input: x.unsqueeze(1) => Cin0 = 1, so the lane-folded row is
        # just the image row. Lane-aligned interior write.
        buf0[1:H + 1, 0:W] = x_ref[0]

        src = buf0
        ping_pong = (buf_a, buf_b)
        for l in range(n_layers):                      # unrolled at trace time
            wband = layer_refs[2 * l]                  # (3, Kin_l, W*cout)
            bias = layer_refs[2 * l + 1]               # (1, W*cout)

            # 3 banded matmuls (one per dy tap), f32 accumulate on the MXU.
            acc = jnp.zeros((H, W * cout), jnp.float32)
            for dy in range(3):
                acc = acc + jnp.dot(
                    src[dy:dy + H, :], wband[dy],
                    preferred_element_type=jnp.float32)

            # bias + ReLU (Dropout = identity at inference).
            y = jnp.maximum(acc + bias[...], 0.0)

            if l == n_layers - 1:
                o_ref[0] = y.astype(o_ref.dtype)       # unmasked 128-lane store
            else:
                dst = ping_pong[l % 2]
                dst[1:H + 1, 0:W * cout] = y           # lane-aligned interior
                src = dst

    return kernel


# ----------------------------------------------------------------------------
# Parameter preparation (HWIO conv weights -> banded matrices, done once)
# ----------------------------------------------------------------------------
def _banded_conv_weights(w, W):
    """w: (3, 3, Cin, Cout) HWIO  ->  (3, (W+2)*Cin, W*Cout), one band per dy.

    band_dy[row, ow*Cout + co] = w[dy, dx, ci, co] with
      row = (ow+dx-1)*Cin + ci  if the tap is inside the image,
      row = W*Cin + ci          (an always-zero padding column) otherwise.
    """
    _, _, Cin, Cout = w.shape
    Kin, Kout = (W + 2) * Cin, W * Cout

    ow = np.arange(W)[:, None, None, None]
    dx = np.arange(3)[None, :, None, None]
    ci = np.arange(Cin)[None, None, :, None]
    co = np.arange(Cout)[None, None, None, :]

    iw = ow + dx - 1                                   # input column (may be pad)
    rows = np.where((iw >= 0) & (iw < W), iw * Cin + ci, W * Cin + ci)
    cols = ow * Cout + co

    shape = (W, 3, Cin, Cout)
    rows = np.broadcast_to(rows, shape).reshape(-1)
    cols = np.broadcast_to(cols, shape).reshape(-1)

    bands = []
    for dy in range(3):
        vals = jnp.broadcast_to(w[dy][None], shape).reshape(-1)
        bands.append(jnp.zeros((Kin, Kout), w.dtype).at[rows, cols].set(vals))
    return jnp.stack(bands)                            # (3, Kin, Kout)


def prepare_conv_block_params(params, W):
    """[(w_hwio, b), ...] -> tuple of (banded_weight, bias_tiled_over_W)."""
    prepared = []
    for w, b in params:
        cout = w.shape[-1]
        prepared.append((_banded_conv_weights(w, W),
                         jnp.tile(b, W).reshape(1, W * cout)))
    return tuple(prepared)


def init_conv_block_params(key, in_channels, out_channels, n_layers=4):
    """Deterministic synthetic HWIO parameters (PyTorch-like fan-in scaling)."""
    params = []
    cin = in_channels
    for _ in range(n_layers):
        key, kw, kb = jax.random.split(key, 3)
        fan_in = cin * 3 * 3
        bound = 1.0 / jnp.sqrt(fan_in)
        w = jax.random.uniform(kw, (3, 3, cin, out_channels), jnp.float32,
                               -bound, bound)
        b = jax.random.uniform(kb, (out_channels,), jnp.float32, -bound, bound)
        params.append((w, b))
        cin = out_channels
    return params


# ----------------------------------------------------------------------------
# Forward pass
# ----------------------------------------------------------------------------
@jax.jit
def conv_block_forward(x_bhw, banded_params):
    """ConvBlock forward.

    x_bhw:         (B, H, W) float32 (the module unsqueezes the channel dim).
    banded_params: tuple of (wband (3, Kin_l, W*Cout), bias (1, W*Cout)).
    returns        (B, Cout, H, W) float32 (NCHW, matching PyTorch).
    """
    B, H, W = x_bhw.shape
    n_layers = len(banded_params)
    cout = banded_params[-1][1].shape[-1] // W

    kernel = _make_conv_block_kernel(n_layers, H, W, cout)

    flat_inputs = [x_bhw]
    in_specs = [pl.BlockSpec((1, H, W), lambda b: (b, 0, 0))]
    for wband, bias in banded_params:
        flat_inputs += [wband, bias]
        in_specs += [pl.BlockSpec(wband.shape, lambda b: (0, 0, 0)),
                     pl.BlockSpec(bias.shape, lambda b: (0, 0))]

    out = pl.pallas_call(
        kernel,
        grid=(B,),
        in_specs=in_specs,
        out_specs=pl.BlockSpec((1, H, W * cout), lambda b: (b, 0, 0)),
        out_shape=jax.ShapeDtypeStruct((B, H, W * cout), jnp.float32),
        scratch_shapes=[
            pltpu.VMEM((H + 2, W + 2), jnp.float32),            # layer-1 input
            pltpu.VMEM((H + 2, (W + 2) * cout), jnp.float32),   # ping
            pltpu.VMEM((H + 2, (W + 2) * cout), jnp.float32),   # pong
        ],
        compiler_params=pltpu.CompilerParams(
            dimension_semantics=("parallel",)),      # 2x on v7x (2 TCs/chip)
    )(*flat_inputs)

    # Tiny (8 KB) layout fixup: lane-dense (B, H, W*Cout) -> NCHW.
    return jnp.transpose(out.reshape(B, H, W, cout), (0, 3, 1, 2))


def conv_block_reference(x_bhw, params):
    """Pure-JAX reference (lax conv) for correctness checking."""
    h = x_bhw[..., None]                               # (B, H, W, 1)
    for w, b in params:
        h = jax.lax.conv_general_dilated(
            h, w, window_strides=(1, 1), padding="SAME",
            dimension_numbers=("NHWC", "HWIO", "NHWC"))
        h = jnp.maximum(h + b, 0.0)
    return jnp.transpose(h, (0, 3, 1, 2))              # NCHW


if __name__ == "__main__":
    B, H, W = 2, 16, 16
    in_channels, out_channels, n_layers = 1, 8, 4      # W*Cout = 128 (lane-dense)

    key = jax.random.PRNGKey(0)
    key, kx = jax.random.split(key)
    x = jax.random.normal(kx, (B, H, W), jnp.float32)

    params = init_conv_block_params(key, in_channels, out_channels, n_layers)
    banded = prepare_conv_block_params(params, W)

    out = conv_block_forward(x, banded)
    out = jax.block_until_ready(out)
    assert out.shape == (B, out_channels, H, W), out.shape

    # Correctness vs. a pure-JAX conv reference (loose tol: MXU f32 matmul
    # precision differs slightly from XLA's conv path).
    ref = conv_block_reference(x, params)
    err = float(jnp.max(jnp.abs(out - ref)))
    assert err < 5e-2, f"max abs error vs reference conv: {err}"

    # TODO(synk): training-mode Dropout (in-kernel PRNG masking) not implemented;
    # inference treats Dropout as identity, matching eval() semantics.
    print("KERNEL_OK")
</pallas_src>

<mosaic_0001>
module attributes {stable_mosaic.version = 11 : i64} {
  func.func @kernel(%arg0: i32, %arg1: memref<1x16x16xf32, #tpu.memory_space<vmem>>, %arg2: memref<3x18x128xf32, #tpu.memory_space<vmem>>, %arg3: memref<1x128xf32, #tpu.memory_space<vmem>>, %arg4: memref<3x144x128xf32, #tpu.memory_space<vmem>>, %arg5: memref<1x128xf32, #tpu.memory_space<vmem>>, %arg6: memref<3x144x128xf32, #tpu.memory_space<vmem>>, %arg7: memref<1x128xf32, #tpu.memory_space<vmem>>, %arg8: memref<3x144x128xf32, #tpu.memory_space<vmem>>, %arg9: memref<1x128xf32, #tpu.memory_space<vmem>>, %arg10: memref<1x16x128xf32, #tpu.memory_space<vmem>>, %arg11: memref<18x18xf32, #tpu.memory_space<vmem>>, %arg12: memref<18x144xf32, #tpu.memory_space<vmem>>, %arg13: memref<18x144xf32, #tpu.memory_space<vmem>>) attributes {dimension_semantics = [#tpu.dimension_semantics<parallel>], iteration_bounds = array<i64: 2>, scalar_prefetch = 0 : i64, scratch_operands = 3 : i64, tpu.core_type = #tpu.core_type<tc>, window_params = [{transform_indices = @transform_0, window_bounds = array<i64: 1, 16, 16>}, {pipeline_mode = #tpu.pipeline_mode<synchronous>, transform_indices = @transform_1, window_bounds = array<i64: 3, 18, 128>}, {pipeline_mode = #tpu.pipeline_mode<synchronous>, transform_indices = @transform_2, window_bounds = array<i64: 1, 128>}, {pipeline_mode = #tpu.pipeline_mode<synchronous>, transform_indices = @transform_3, window_bounds = array<i64: 3, 144, 128>}, {pipeline_mode = #tpu.pipeline_mode<synchronous>, transform_indices = @transform_4, window_bounds = array<i64: 1, 128>}, {pipeline_mode = #tpu.pipeline_mode<synchronous>, transform_indices = @transform_5, window_bounds = array<i64: 3, 144, 128>}, {pipeline_mode = #tpu.pipeline_mode<synchronous>, transform_indices = @transform_6, window_bounds = array<i64: 1, 128>}, {pipeline_mode = #tpu.pipeline_mode<synchronous>, transform_indices = @transform_7, window_bounds = array<i64: 3, 144, 128>}, {pipeline_mode = #tpu.pipeline_mode<synchronous>, transform_indices = @transform_8, window_bounds = array<i64: 1, 128>}, {transform_indices = @transform_9, window_bounds = array<i64: 1, 16, 128>}]} {
    %cst = arith.constant 0.000000e+00 : f32
    %0 = vector.broadcast %cst : f32 to vector<18x18xf32>
    %c0 = arith.constant 0 : index
    %c0_0 = arith.constant 0 : index
    %1 = vector.load %arg11[%c0, %c0_0] : memref<18x18xf32, #tpu.memory_space<vmem>>, vector<18x18xf32>
    tpu.vector_store %arg11[%c0, %c0_0], %0 {strides = array<i32>} : memref<18x18xf32, #tpu.memory_space<vmem>>, vector<18x18xf32>,
    %cst_1 = arith.constant 0.000000e+00 : f32
    %2 = vector.broadcast %cst_1 : f32 to vector<18x144xf32>
    %c0_2 = arith.constant 0 : index
    %c0_3 = arith.constant 0 : index
    %3 = vector.load %arg12[%c0_2, %c0_3] : memref<18x144xf32, #tpu.memory_space<vmem>>, vector<18x144xf32>
    tpu.vector_store %arg12[%c0_2, %c0_3], %2 {strides = array<i32>} : memref<18x144xf32, #tpu.memory_space<vmem>>, vector<18x144xf32>,
    %cst_4 = arith.constant 0.000000e+00 : f32
    %4 = vector.broadcast %cst_4 : f32 to vector<18x144xf32>
    %c0_5 = arith.constant 0 : index
    %c0_6 = arith.constant 0 : index
    %5 = vector.load %arg13[%c0_5, %c0_6] : memref<18x144xf32, #tpu.memory_space<vmem>>, vector<18x144xf32>
    tpu.vector_store %arg13[%c0_5, %c0_6], %4 {strides = array<i32>} : memref<18x144xf32, #tpu.memory_space<vmem>>, vector<18x144xf32>,
    %c0_7 = arith.constant 0 : index
    %c0_8 = arith.constant 0 : index
    %c0_9 = arith.constant 0 : index
    %6 = vector.load %arg1[%c0_7, %c0_8, %c0_9] : memref<1x16x16xf32, #tpu.memory_space<vmem>>, vector<1x16x16xf32>
    %7 = vector.shape_cast %6 : vector<1x16x16xf32> to vector<16x16xf32>
    %c1 = arith.constant 1 : index
    %c0_10 = arith.constant 0 : index
    %8 = vector.load %arg11[%c1, %c0_10] : memref<18x18xf32, #tpu.memory_space<vmem>>, vector<16x16xf32>
    tpu.vector_store %arg11[%c1, %c0_10], %7 {strides = array<i32>} : memref<18x18xf32, #tpu.memory_space<vmem>>, vector<16x16xf32>,
    %cst_11 = arith.constant 0.000000e+00 : f32
    %9 = vector.broadcast %cst_11 : f32 to vector<16x128xf32>
    %c0_12 = arith.constant 0 : index
    %c0_13 = arith.constant 0 : index
    %10 = vector.load %arg11[%c0_12, %c0_13] : memref<18x18xf32, #tpu.memory_space<vmem>>, vector<16x18xf32>
    %c0_14 = arith.constant 0 : index
    %c0_15 = arith.constant 0 : index
    %c0_16 = arith.constant 0 : index
    %11 = vector.load %arg2[%c0_14, %c0_15, %c0_16] : memref<3x18x128xf32, #tpu.memory_space<vmem>>, vector<1x18x128xf32>
    %12 = vector.shape_cast %11 : vector<1x18x128xf32> to vector<18x128xf32>
    %cst_17 = arith.constant dense<0.000000e+00> : vector<16x128xf32>
    %13 = tpu.matmul %10, %12, %cst_17 {dimension_numbers = #tpu.dot_dimension_numbers<[1], [0], [0], [1], [0, 0, 1, 1], [], []>} : vector<16x18xf32>, vector<18x128xf32>, vector<16x128xf32> -> vector<16x128xf32>
    %14 = arith.addf %9, %13 : vector<16x128xf32>
    %c1_18 = arith.constant 1 : index
    %c0_19 = arith.constant 0 : index
    %15 = vector.load %arg11[%c1_18, %c0_19] : memref<18x18xf32, #tpu.memory_space<vmem>>, vector<16x18xf32>
    %c1_20 = arith.constant 1 : index
    %c0_21 = arith.constant 0 : index
    %c0_22 = arith.constant 0 : index
    %16 = vector.load %arg2[%c1_20, %c0_21, %c0_22] : memref<3x18x128xf32, #tpu.memory_space<vmem>>, vector<1x18x128xf32>
    %17 = vector.shape_cast %16 : vector<1x18x128xf32> to vector<18x128xf32>
    %cst_23 = arith.constant dense<0.000000e+00> : vector<16x128xf32>
    %18 = tpu.matmul %15, %17, %cst_23 {dimension_numbers = #tpu.dot_dimension_numbers<[1], [0], [0], [1], [0, 0, 1, 1], [], []>} : vector<16x18xf32>, vector<18x128xf32>, vector<16x128xf32> -> vector<16x128xf32>
    %19 = arith.addf %14, %18 : vector<16x128xf32>
    %c2 = arith.constant 2 : index
    %c0_24 = arith.constant 0 : index
    %20 = vector.load %arg11[%c2, %c0_24] : memref<18x18xf32, #tpu.memory_space<vmem>>, vector<16x18xf32>
    %c2_25 = arith.constant 2 : index
    %c0_26 = arith.constant 0 : index
    %c0_27 = arith.constant 0 : index
    %21 = vector.load %arg2[%c2_25, %c0_26, %c0_27] : memref<3x18x128xf32, #tpu.memory_space<vmem>>, vector<1x18x128xf32>
    %22 = vector.shape_cast %21 : vector<1x18x128xf32> to vector<18x128xf32>
    %cst_28 = arith.constant dense<0.000000e+00> : vector<16x128xf32>
    %23 = tpu.matmul %20, %22, %cst_28 {dimension_numbers = #tpu.dot_dimension_numbers<[1], [0], [0], [1], [0, 0, 1, 1], [], []>} : vector<16x18xf32>, vector<18x128xf32>, vector<16x128xf32> -> vector<16x128xf32>
    %24 = arith.addf %19, %23 : vector<16x128xf32>
    %c0_29 = arith.constant 0 : index
    %c0_30 = arith.constant 0 : index
    %25 = vector.load %arg3[%c0_29, %c0_30] : memref<1x128xf32, #tpu.memory_space<vmem>>, vector<1x128xf32>
    %26 = vector.broadcast %25 : vector<1x128xf32> to vector<16x128xf32>
    %27 = arith.addf %24, %26 : vector<16x128xf32>
    %cst_31 = arith.constant 0.000000e+00 : f32
    %28 = vector.broadcast %cst_31 : f32 to vector<16x128xf32>
    %29 = arith.maximumf %27, %28 : vector<16x128xf32>
    %c1_32 = arith.constant 1 : index
    %c0_33 = arith.constant 0 : index
    %30 = vector.load %arg12[%c1_32, %c0_33] : memref<18x144xf32, #tpu.memory_space<vmem>>, vector<16x128xf32>
    tpu.vector_store %arg12[%c1_32, %c0_33], %29 {strides = array<i32>} : memref<18x144xf32, #tpu.memory_space<vmem>>, vector<16x128xf32>,
    %cst_34 = arith.constant 0.000000e+00 : f32
    %31 = vector.broadcast %cst_34 : f32 to vector<16x128xf32>
    %c0_35 = arith.constant 0 : index
    %c0_36 = arith.constant 0 : index
    %32 = vector.load %arg12[%c0_35, %c0_36] : memref<18x144xf32, #tpu.memory_space<vmem>>, vector<16x144xf32>
    %c0_37 = arith.constant 0 : index
    %c0_38 = arith.constant 0 : index
    %c0_39 = arith.constant 0 : index
    %33 = vector.load %arg4[%c0_37, %c0_38, %c0_39] : memref<3x144x128xf32, #tpu.memory_space<vmem>>, vector<1x144x128xf32>
    %34 = vector.shape_cast %33 : vector<1x144x128xf32> to vector<144x128xf32>
    %cst_40 = arith.constant dense<0.000000e+00> : vector<16x128xf32>
    %35 = tpu.matmul %32, %34, %cst_40 {dimension_numbers = #tpu.dot_dimension_numbers<[1], [0], [0], [1], [0, 0, 1, 1], [], []>} : vector<16x144xf32>, vector<144x128xf32>, vector<16x128xf32> -> vector<16x128xf32>
    %36 = arith.addf %31, %35 : vector<16x128xf32>
    %c1_41 = arith.constant 1 : index
    %c0_42 = arith.constant 0 : index
    %37 = vector.load %arg12[%c1_41, %c0_42] : memref<18x144xf32, #tpu.memory_space<vmem>>, vector<16x144xf32>
    %c1_43 = arith.constant 1 : index
    %c0_44 = arith.constant 0 : index
    %c0_45 = arith.constant 0 : index
    %38 = vector.load %arg4[%c1_43, %c0_44, %c0_45] : memref<3x144x128xf32, #tpu.memory_space<vmem>>, vector<1x144x128xf32>
    %39 = vector.shape_cast %38 : vector<1x144x128xf32> to vector<144x128xf32>
    %cst_46 = arith.constant dense<0.000000e+00> : vector<16x128xf32>
    %40 = tpu.matmul %37, %39, %cst_46 {dimension_numbers = #tpu.dot_dimension_numbers<[1], [0], [0], [1], [0, 0, 1, 1], [], []>} : vector<16x144xf32>, vector<144x128xf32>, vector<16x128xf32> -> vector<16x128xf32>
    %41 = arith.addf %36, %40 : vector<16x128xf32>
    %c2_47 = arith.constant 2 : index
    %c0_48 = arith.constant 0 : index
    %42 = vector.load %arg12[%c2_47, %c0_48] : memref<18x144xf32, #tpu.memory_space<vmem>>, vector<16x144xf32>
    %c2_49 = arith.constant 2 : index
    %c0_50 = arith.constant 0 : index
    %c0_51 = arith.constant 0 : index
    %43 = vector.load %arg4[%c2_49, %c0_50, %c0_51] : memref<3x144x128xf32, #tpu.memory_space<vmem>>, vector<1x144x128xf32>
    %44 = vector.shape_cast %43 : vector<1x144x128xf32> to vector<144x128xf32>
    %cst_52 = arith.constant dense<0.000000e+00> : vector<16x128xf32>
    %45 = tpu.matmul %42, %44, %cst_52 {dimension_numbers = #tpu.dot_dimension_numbers<[1], [0], [0], [1], [0, 0, 1, 1], [], []>} : vector<16x144xf32>, vector<144x128xf32>, vector<16x128xf32> -> vector<16x128xf32>
    %46 = arith.addf %41, %45 : vector<16x128xf32>
    %c0_53 = arith.constant 0 : index
    %c0_54 = arith.constant 0 : index
    %47 = vector.load %arg5[%c0_53, %c0_54] : memref<1x128xf32, #tpu.memory_space<vmem>>, vector<1x128xf32>
    %48 = vector.broadcast %47 : vector<1x128xf32> to vector<16x128xf32>
    %49 = arith.addf %46, %48 : vector<16x128xf32>
    %cst_55 = arith.constant 0.000000e+00 : f32
    %50 = vector.broadcast %cst_55 : f32 to vector<16x128xf32>
    %51 = arith.maximumf %49, %50 : vector<16x128xf32>
    %c1_56 = arith.constant 1 : index
    %c0_57 = arith.constant 0 : index
    %52 = vector.load %arg13[%c1_56, %c0_57] : memref<18x144xf32, #tpu.memory_space<vmem>>, vector<16x128xf32>
    tpu.vector_store %arg13[%c1_56, %c0_57], %51 {strides = array<i32>} : memref<18x144xf32, #tpu.memory_space<vmem>>, vector<16x128xf32>,
    %cst_58 = arith.constant 0.000000e+00 : f32
    %53 = vector.broadcast %cst_58 : f32 to vector<16x128xf32>
    %c0_59 = arith.constant 0 : index
    %c0_60 = arith.constant 0 : index
    %54 = vector.load %arg13[%c0_59, %c0_60] : memref<18x144xf32, #tpu.memory_space<vmem>>, vector<16x144xf32>
    %c0_61 = arith.constant 0 : index
    %c0_62 = arith.constant 0 : index
    %c0_63 = arith.constant 0 : index
    %55 = vector.load %arg6[%c0_61, %c0_62, %c0_63] : memref<3x144x128xf32, #tpu.memory_space<vmem>>, vector<1x144x128xf32>
    %56 = vector.shape_cast %55 : vector<1x144x128xf32> to vector<144x128xf32>
    %cst_64 = arith.constant dense<0.000000e+00> : vector<16x128xf32>
    %57 = tpu.matmul %54, %56, %cst_64 {dimension_numbers = #tpu.dot_dimension_numbers<[1], [0], [0], [1], [0, 0, 1, 1], [], []>} : vector<16x144xf32>, vector<144x128xf32>, vector<16x128xf32> -> vector<16x128xf32>
    %58 = arith.addf %53, %57 : vector<16x128xf32>
    %c1_65 = arith.constant 1 : index
    %c0_66 = arith.constant 0 : index
    %59 = vector.load %arg13[%c1_65, %c0_66] : memref<18x144xf32, #tpu.memory_space<vmem>>, vector<16x144xf32>
    %c1_67 = arith.constant 1 : index
    %c0_68 = arith.constant 0 : index
    %c0_69 = arith.constant 0 : index
    %60 = vector.load %arg6[%c1_67, %c0_68, %c0_69] : memref<3x144x128xf32, #tpu.memory_space<vmem>>, vector<1x144x128xf32>
    %61 = vector.shape_cast %60 : vector<1x144x128xf32> to vector<144x128xf32>
    %cst_70 = arith.constant dense<0.000000e+00> : vector<16x128xf32>
    %62 = tpu.matmul %59, %61, %cst_70 {dimension_numbers = #tpu.dot_dimension_numbers<[1], [0], [0], [1], [0, 0, 1, 1], [], []>} : vector<16x144xf32>, vector<144x128xf32>, vector<16x128xf32> -> vector<16x128xf32>
    %63 = arith.addf %58, %62 : vector<16x128xf32>
    %c2_71 = arith.constant 2 : index
    %c0_72 = arith.constant 0 : index
    %64 = vector.load %arg13[%c2_71, %c0_72] : memref<18x144xf32, #tpu.memory_space<vmem>>, vector<16x144xf32>
    %c2_73 = arith.constant 2 : index
    %c0_74 = arith.constant 0 : index
    %c0_75 = arith.constant 0 : index
    %65 = vector.load %arg6[%c2_73, %c0_74, %c0_75] : memref<3x144x128xf32, #tpu.memory_space<vmem>>, vector<1x144x128xf32>
    %66 = vector.shape_cast %65 : vector<1x144x128xf32> to vector<144x128xf32>
    %cst_76 = arith.constant dense<0.000000e+00> : vector<16x128xf32>
    %67 = tpu.matmul %64, %66, %cst_76 {dimension_numbers = #tpu.dot_dimension_numbers<[1], [0], [0], [1], [0, 0, 1, 1], [], []>} : vector<16x144xf32>, vector<144x128xf32>, vector<16x128xf32> -> vector<16x128xf32>
    %68 = arith.addf %63, %67 : vector<16x128xf32>
    %c0_77 = arith.constant 0 : index
    %c0_78 = arith.constant 0 : index
    %69 = vector.load %arg7[%c0_77, %c0_78] : memref<1x128xf32, #tpu.memory_space<vmem>>, vector<1x128xf32>
    %70 = vector.broadcast %69 : vector<1x128xf32> to vector<16x128xf32>
    %71 = arith.addf %68, %70 : vector<16x128xf32>
    %cst_79 = arith.constant 0.000000e+00 : f32
    %72 = vector.broadcast %cst_79 : f32 to vector<16x128xf32>
    %73 = arith.maximumf %71, %72 : vector<16x128xf32>
    %c1_80 = arith.constant 1 : index
    %c0_81 = arith.constant 0 : index
    %74 = vector.load %arg12[%c1_80, %c0_81] : memref<18x144xf32, #tpu.memory_space<vmem>>, vector<16x128xf32>
    tpu.vector_store %arg12[%c1_80, %c0_81], %73 {strides = array<i32>} : memref<18x144xf32, #tpu.memory_space<vmem>>, vector<16x128xf32>,
    %cst_82 = arith.constant 0.000000e+00 : f32
    %75 = vector.broadcast %cst_82 : f32 to vector<16x128xf32>
    %c0_83 = arith.constant 0 : index
    %c0_84 = arith.constant 0 : index
    %76 = vector.load %arg12[%c0_83, %c0_84] : memref<18x144xf32, #tpu.memory_space<vmem>>, vector<16x144xf32>
    %c0_85 = arith.constant 0 : index
    %c0_86 = arith.constant 0 : index
    %c0_87 = arith.constant 0 : index
    %77 = vector.load %arg8[%c0_85, %c0_86, %c0_87] : memref<3x144x128xf32, #tpu.memory_space<vmem>>, vector<1x144x128xf32>
    %78 = vector.shape_cast %77 : vector<1x144x128xf32> to vector<144x128xf32>
    %cst_88 = arith.constant dense<0.000000e+00> : vector<16x128xf32>
    %79 = tpu.matmul %76, %78, %cst_88 {dimension_numbers = #tpu.dot_dimension_numbers<[1], [0], [0], [1], [0, 0, 1, 1], [], []>} : vector<16x144xf32>, vector<144x128xf32>, vector<16x128xf32> -> vector<16x128xf32>
    %80 = arith.addf %75, %79 : vector<16x128xf32>
    %c1_89 = arith.constant 1 : index
    %c0_90 = arith.constant 0 : index
    %81 = vector.load %arg12[%c1_89, %c0_90] : memref<18x144xf32, #tpu.memory_space<vmem>>, vector<16x144xf32>
    %c1_91 = arith.constant 1 : index
    %c0_92 = arith.constant 0 : index
    %c0_93 = arith.constant 0 : index
    %82 = vector.load %arg8[%c1_91, %c0_92, %c0_93] : memref<3x144x128xf32, #tpu.memory_space<vmem>>, vector<1x144x128xf32>
    %83 = vector.shape_cast %82 : vector<1x144x128xf32> to vector<144x128xf32>
    %cst_94 = arith.constant dense<0.000000e+00> : vector<16x128xf32>
    %84 = tpu.matmul %81, %83, %cst_94 {dimension_numbers = #tpu.dot_dimension_numbers<[1], [0], [0], [1], [0, 0, 1, 1], [], []>} : vector<16x144xf32>, vector<144x128xf32>, vector<16x128xf32> -> vector<16x128xf32>
    %85 = arith.addf %80, %84 : vector<16x128xf32>
    %c2_95 = arith.constant 2 : index
    %c0_96 = arith.constant 0 : index
    %86 = vector.load %arg12[%c2_95, %c0_96] : memref<18x144xf32, #tpu.memory_space<vmem>>, vector<16x144xf32>
    %c2_97 = arith.constant 2 : index
    %c0_98 = arith.constant 0 : index
    %c0_99 = arith.constant 0 : index
    %87 = vector.load %arg8[%c2_97, %c0_98, %c0_99] : memref<3x144x128xf32, #tpu.memory_space<vmem>>, vector<1x144x128xf32>
    %88 = vector.shape_cast %87 : vector<1x144x128xf32> to vector<144x128xf32>
    %cst_100 = arith.constant dense<0.000000e+00> : vector<16x128xf32>
    %89 = tpu.matmul %86, %88, %cst_100 {dimension_numbers = #tpu.dot_dimension_numbers<[1], [0], [0], [1], [0, 0, 1, 1], [], []>} : vector<16x144xf32>, vector<144x128xf32>, vector<16x128xf32> -> vector<16x128xf32>
    %90 = arith.addf %85, %89 : vector<16x128xf32>
    %c0_101 = arith.constant 0 : index
    %c0_102 = arith.constant 0 : index
    %91 = vector.load %arg9[%c0_101, %c0_102] : memref<1x128xf32, #tpu.memory_space<vmem>>, vector<1x128xf32>
    %92 = vector.broadcast %91 : vector<1x128xf32> to vector<16x128xf32>
    %93 = arith.addf %90, %92 : vector<16x128xf32>
    %cst_103 = arith.constant 0.000000e+00 : f32
    %94 = vector.broadcast %cst_103 : f32 to vector<16x128xf32>
    %95 = arith.maximumf %93, %94 : vector<16x128xf32>
    %c0_104 = arith.constant 0 : index
    %c0_105 = arith.constant 0 : index
    %c0_106 = arith.constant 0 : index
    %96 = vector.load %arg10[%c0_104, %c0_105, %c0_106] : memref<1x16x128xf32, #tpu.memory_space<vmem>>, vector<1x16x128xf32>
    %97 = vector.shape_cast %96 : vector<1x16x128xf32> to vector<16x128xf32>
    %98 = vector.shape_cast %95 : vector<16x128xf32> to vector<1x16x128xf32>
    tpu.vector_store %arg10[%c0_104, %c0_105, %c0_106], %98 {strides = array<i32>} : memref<1x16x128xf32, #tpu.memory_space<vmem>>, vector<1x16x128xf32>,
    return
  }
  func.func @transform_0(%arg0: i32) -> (i32, i32, i32) {
    %c0_i32 = arith.constant 0 : i32
    %c0_i32_0 = arith.constant 0 : i32
    %c0_i32_1 = arith.constant 0 : i32
    return %arg0, %c0_i32, %c0_i32_0 : i32, i32, i32
  }
  func.func @transform_1(%arg0: i32) -> (i32, i32, i32) {
    %c0_i32 = arith.constant 0 : i32
    %c0_i32_0 = arith.constant 0 : i32
    %c0_i32_1 = arith.constant 0 : i32
    %c0_i32_2 = arith.constant 0 : i32
    return %c0_i32, %c0_i32_0, %c0_i32_1 : i32, i32, i32
  }
  func.func @transform_2(%arg0: i32) -> (i32, i32) {
    %c0_i32 = arith.constant 0 : i32
    %c0_i32_0 = arith.constant 0 : i32
    %c0_i32_1 = arith.constant 0 : i32
    return %c0_i32, %c0_i32_0 : i32, i32
  }
  func.func @transform_3(%arg0: i32) -> (i32, i32, i32) {
    %c0_i32 = arith.constant 0 : i32
    %c0_i32_0 = arith.constant 0 : i32
    %c0_i32_1 = arith.constant 0 : i32
    %c0_i32_2 = arith.constant 0 : i32
    return %c0_i32, %c0_i32_0, %c0_i32_1 : i32, i32, i32
  }
  func.func @transform_4(%arg0: i32) -> (i32, i32) {
    %c0_i32 = arith.constant 0 : i32
    %c0_i32_0 = arith.constant 0 : i32
    %c0_i32_1 = arith.constant 0 : i32
    return %c0_i32, %c0_i32_0 : i32, i32
  }
  func.func @transform_5(%arg0: i32) -> (i32, i32, i32) {
    %c0_i32 = arith.constant 0 : i32
    %c0_i32_0 = arith.constant 0 : i32
    %c0_i32_1 = arith.constant 0 : i32
    %c0_i32_2 = arith.constant 0 : i32
    return %c0_i32, %c0_i32_0, %c0_i32_1 : i32, i32, i32
  }
  func.func @transform_6(%arg0: i32) -> (i32, i32) {
    %c0_i32 = arith.constant 0 : i32
    %c0_i32_0 = arith.constant 0 : i32
    %c0_i32_1 = arith.constant 0 : i32
    return %c0_i32, %c0_i32_0 : i32, i32
  }
  func.func @transform_7(%arg0: i32) -> (i32, i32, i32) {
    %c0_i32 = arith.constant 0 : i32
    %c0_i32_0 = arith.constant 0 : i32
    %c0_i32_1 = arith.constant 0 : i32
    %c0_i32_2 = arith.constant 0 : i32
    return %c0_i32, %c0_i32_0, %c0_i32_1 : i32, i32, i32
  }
  func.func @transform_8(%arg0: i32) -> (i32, i32) {
    %c0_i32 = arith.constant 0 : i32
    %c0_i32_0 = arith.constant 0 : i32
    %c0_i32_1 = arith.constant 0 : i32
    return %c0_i32, %c0_i32_0 : i32, i32
  }
  func.func @transform_9(%arg0: i32) -> (i32, i32, i32) {
    %c0_i32 = arith.constant 0 : i32
    %c0_i32_0 = arith.constant 0 : i32
    %c0_i32_1 = arith.constant 0 : i32
    return %arg0, %c0_i32, %c0_i32_0 : i32, i32, i32
  }
}

</mosaic_0001>

<llo_original>
// kernel: conv_block_forward.1
$region0: #{conv_block_forward.1}
  #allocation0 [shape = 'u32[]', space=smem, size = 0x4, offset = 0x4, fixed_abs, tag = 'smem constant byte address 0x4 - core index']
  #allocation1 [shape = 'u32[72,128]{1,0:T(1,128)}', space=vmem, size = 0x9000, scoped, tag = 'internal scratch']
  #allocation2 [shape = 'f32[18,18]{1,0:T(8,128)}', space=vmem, size = 0x3000, scoped, tag = 'scratch operand']
  #allocation3 [shape = 'f32[18,144]{1,0:T(8,128)}', space=vmem, size = 0x6000, scoped, tag = 'scratch operand']
  #allocation4 [shape = 'f32[18,144]{1,0:T(8,128)}', space=vmem, size = 0x6000, scoped, tag = 'scratch operand']
  %s0 = inlined_call_operand.hbm [shape: f32[2,16,16], index: 0, kind: input, shape index: {}]
  %s1 = inlined_call_operand.hbm [shape: f32[3,18,128], index: 1, kind: input, shape index: {}]
  %s2 = inlined_call_operand.vmem [shape: f32[1,128], index: 2, kind: input, shape index: {}]
  %s3 = inlined_call_operand.hbm [shape: f32[3,144,128], index: 3, kind: input, shape index: {}]
  %s4 = inlined_call_operand.vmem [shape: f32[1,128], index: 4, kind: input, shape index: {}]
  %s5 = inlined_call_operand.hbm [shape: f32[3,144,128], index: 5, kind: input, shape index: {}]
  %s6 = inlined_call_operand.vmem [shape: f32[1,128], index: 6, kind: input, shape index: {}]
  %s7 = inlined_call_operand.hbm [shape: f32[3,144,128], index: 7, kind: input, shape index: {}]
  %s8 = inlined_call_operand.vmem [shape: f32[1,128], index: 8, kind: input, shape index: {}]
  %s9 = inlined_call_operand.vmem [shape: f32[2,16,128], index: 9, kind: output, shape index: {}]
  %s10 = sld [smem:[#allocation0]]
  $region89: #{conv_block_forward.1} parent=0
    _
  %s12 = ssub.s32 1, %s10
  %s13 = scalar_select 0, %s12, %s10
  $region1: #{conv_block_forward.1} parent=0
    #allocation5 [shape = 'u8[16384]{0}', space=vmem, size = 0x4000, scoped, tag = 'input window, operand 0']
    #allocation6 [shape = 's32[2]{0}', space=sflag, size = 0x8, scoped, tag = 'scoped memory for conv_block_forward.1']
    #allocation7 [shape = 'u8[36864]{0}', space=vmem, size = 0x9000, scoped, tag = 'input window, operand 1, single buffered']
    #allocation8 [shape = 's32[1]{0}', space=sflag, size = 0x4, scoped, tag = 'scoped memory for conv_block_forward.1']
    #allocation9 [shape = 'u8[221184]{0}', space=vmem, size = 0x36000, scoped, tag = 'input window, operand 3, single buffered']
    #allocation10 [shape = 'u8[221184]{0}', space=vmem, size = 0x36000, scoped, tag = 'input window, operand 5, single buffered']
    #allocation11 [shape = 's32[1]{0}', space=sflag, size = 0x4, scoped, tag = 'scoped memory for conv_block_forward.1']
    #allocation12 [shape = 'u8[221184]{0}', space=vmem, size = 0x36000, scoped, tag = 'input window, operand 7, single buffered']
    %14 = vsyncpa [#allocation6], 0
    %s15 = scalar_lea.sflag [#allocation6], 1
    %16 = vsyncpa %s15, 0
    %17 = vsyncpa [#allocation8], 0
    %18 = vsyncpa [#allocation11], 0
    loop: start=0, step=1, limit=4
    $region2: #{conv_block_forward.1} parent=1 // loop_pre_header
      _
    $region3: #{conv_block_forward.1} parent=1 // loop_header
      %s20 = sphi 0, %s24
      %p21 = scmp.ge.s32.totalorder %s20, 4
      %s30 = sphi 0, %s32
      %s33 = sphi 0, %s30
      %s34 = sphi 0, %s33
      %s50 = sphi 0, %s34
      %s54 = sphi 0, %s54
      %s56 = sphi 0, %s54
      %s57 = sphi 0, %s56
      %s71 = sphi 0, %s57
      %s75 = sphi 0, %s75
      %s77 = sphi 0, %s75
      %s78 = sphi 0, %s77
      %s92 = sphi 0, %s78
      %s96 = sphi 0, %s96
      %s98 = sphi 0, %s96
      %s99 = sphi 0, %s98
      %s113 = sphi 0, %s99
      %s117 = sphi 0, %s117
      %s119 = sphi 0, %s117
      %s120 = sphi 0, %s119
      %s134 = sphi 0, %s120
      %s138 = sphi 0, %s138
      %s140 = sphi 0, %s138
      %s141 = sphi 0, %s140
      %s155 = sphi 0, %s141
      %s159 = sphi 0, %s159
      %s161 = sphi 0, %s159
      %s162 = sphi 0, %s161
      %s176 = sphi 0, %s162
      %s180 = sphi 0, %s180
      %s182 = sphi 0, %s180
      %s183 = sphi 0, %s182
      %s197 = sphi 0, %s183
      %s201 = sphi 0, %s201
      %s203 = sphi 0, %s201
      %s204 = sphi 0, %s203
      %s218 = sphi 0, %s204
      %s224 = sphi 0, %s226
      %s227 = sphi 0, %s224
      %s228 = sphi 0, %s227
      %s244 = sphi 0, %s228
    $region4: #{conv_block_forward.1} parent=1 // loop_header_branch
      %23 = sbr.rel (%p21) target = $region8
    $region5: #{conv_block_forward.1} parent=1 // loop_body
      %s25 = ssub.s32 %s20, 1
      %s26 = ssub.s32 %s20, 2
      %s27 = sadd.s32 %s20, 1
      %s28 = ssub.s32 %s20, %s27
      %p29 = scmp.eq.s32.totalorder %s28, 0
      %s31 = sadd.s32 %s30, 1
      %s32 = scalar_select %p29, %s30, %s31
      %p35 = pneg %p29
      %p36 = scmp.eq.s32.totalorder %s20, 1
      %p37 = por %p35, %p36
      %p38 = scmp.ne.s32.totalorder %s30, %s33
      %p39 = scmp.eq.s32.totalorder %s20, 0
      %p40 = por %p38, %p39
      %p41 = scmp.ne.s32.totalorder %s30, %s33
      %p42 = scmp.eq.s32.totalorder %s25, 1
      %p43 = por %p41, %p42
      %p44 = scmp.ne.s32.totalorder %s33, %s34
      %p45 = scmp.eq.s32.totalorder %s25, 0
      %p46 = por %p44, %p45
      %p47 = scmp.ne.s32.totalorder %s33, %s34
      %p48 = scmp.eq.s32.totalorder %s26, 1
      %p49 = por %p47, %p48
      %p51 = scmp.ne.s32.totalorder %s34, %s50
      %p52 = scmp.eq.s32.totalorder %s26, 0
      %p53 = por %p51, %p52
      %s55 = sadd.s32 %s54, 1
      %p58 = scmp.eq.s32.totalorder %s20, 1
      %p59 = scmp.ne.s32.totalorder %s54, %s56
      %p60 = scmp.eq.s32.totalorder %s20, 0
      %p61 = por %p59, %p60
      %p62 = scmp.ne.s32.totalorder %s54, %s56
      %p63 = scmp.eq.s32.totalorder %s25, 1
      %p64 = por %p62, %p63
      %p65 = scmp.ne.s32.totalorder %s56, %s57
      %p66 = scmp.eq.s32.totalorder %s25, 0
      %p67 = por %p65, %p66
      %p68 = scmp.ne.s32.totalorder %s56, %s57
      %p69 = scmp.eq.s32.totalorder %s26, 1
      %p70 = por %p68, %p69
      %p72 = scmp.ne.s32.totalorder %s57, %s71
      %p73 = scmp.eq.s32.totalorder %s26, 0
      %p74 = por %p72, %p73
      %s76 = sadd.s32 %s75, 1
      %p79 = scmp.eq.s32.totalorder %s20, 1
      %p80 = scmp.ne.s32.totalorder %s75, %s77
      %p81 = scmp.eq.s32.totalorder %s20, 0
      %p82 = por %p80, %p81
      %p83 = scmp.ne.s32.totalorder %s75, %s77
      %p84 = scmp.eq.s32.totalorder %s25, 1
      %p85 = por %p83, %p84
      %p86 = scmp.ne.s32.totalorder %s77, %s78
      %p87 = scmp.eq.s32.totalorder %s25, 0
      %p88 = por %p86, %p87
      %p89 = scmp.ne.s32.totalorder %s77, %s78
      %p90 = scmp.eq.s32.totalorder %s26, 1
      %p91 = por %p89, %p90
      %p93 = scmp.ne.s32.totalorder %s78, %s92
      %p94 = scmp.eq.s32.totalorder %s26, 0
      %p95 = por %p93, %p94
      %s97 = sadd.s32 %s96, 1
      %p100 = scmp.eq.s32.totalorder %s20, 1
      %p101 = scmp.ne.s32.totalorder %s96, %s98
      %p102 = scmp.eq.s32.totalorder %s20, 0
      %p103 = por %p101, %p102
      %p104 = scmp.ne.s32.totalorder %s96, %s98
      %p105 = scmp.eq.s32.totalorder %s25, 1
      %p106 = por %p104, %p105
      %p107 = scmp.ne.s32.totalorder %s98, %s99
      %p108 = scmp.eq.s32.totalorder %s25, 0
      %p109 = por %p107, %p108
      %p110 = scmp.ne.s32.totalorder %s98, %s99
      %p111 = scmp.eq.s32.totalorder %s26, 1
      %p112 = por %p110, %p111
      %p114 = scmp.ne.s32.totalorder %s99, %s113
      %p115 = scmp.eq.s32.totalorder %s26, 0
      %p116 = por %p114, %p115
      %s118 = sadd.s32 %s117, 1
      %p121 = scmp.eq.s32.totalorder %s20, 1
      %p122 = scmp.ne.s32.totalorder %s117, %s119
      %p123 = scmp.eq.s32.totalorder %s20, 0
      %p124 = por %p122, %p123
      %p125 = scmp.ne.s32.totalorder %s117, %s119
      %p126 = scmp.eq.s32.totalorder %s25, 1
      %p127 = por %p125, %p126
      %p128 = scmp.ne.s32.totalorder %s119, %s120
      %p129 = scmp.eq.s32.totalorder %s25, 0
      %p130 = por %p128, %p129
      %p131 = scmp.ne.s32.totalorder %s119, %s120
      %p132 = scmp.eq.s32.totalorder %s26, 1
      %p133 = por %p131, %p132
      %p135 = scmp.ne.s32.totalorder %s120, %s134
      %p136 = scmp.eq.s32.totalorder %s26, 0
      %p137 = por %p135, %p136
      %s139 = sadd.s32 %s138, 1
      %p142 = scmp.eq.s32.totalorder %s20, 1
      %p143 = scmp.ne.s32.totalorder %s138, %s140
      %p144 = scmp.eq.s32.totalorder %s20, 0
      %p145 = por %p143, %p144
      %p146 = scmp.ne.s32.totalorder %s138, %s140
      %p147 = scmp.eq.s32.totalorder %s25, 1
      %p148 = por %p146, %p147
      %p149 = scmp.ne.s32.totalorder %s140, %s141
      %p150 = scmp.eq.s32.totalorder %s25, 0
      %p151 = por %p149, %p150
      %p152 = scmp.ne.s32.totalorder %s140, %s141
      %p153 = scmp.eq.s32.totalorder %s26, 1
      %p154 = por %p152, %p153
      %p156 = scmp.ne.s32.totalorder %s141, %s155
      %p157 = scmp.eq.s32.totalorder %s26, 0
      %p158 = por %p156, %p157
      %s160 = sadd.s32 %s159, 1
      %p163 = scmp.eq.s32.totalorder %s20, 1
      %p164 = scmp.ne.s32.totalorder %s159, %s161
      %p165 = scmp.eq.s32.totalorder %s20, 0
      %p166 = por %p164, %p165
      %p167 = scmp.ne.s32.totalorder %s159, %s161
      %p168 = scmp.eq.s32.totalorder %s25, 1
      %p169 = por %p167, %p168
      %p170 = scmp.ne.s32.totalorder %s161, %s162
      %p171 = scmp.eq.s32.totalorder %s25, 0
      %p172 = por %p170, %p171
      %p173 = scmp.ne.s32.totalorder %s161, %s162
      %p174 = scmp.eq.s32.totalorder %s26, 1
      %p175 = por %p173, %p174
      %p177 = scmp.ne.s32.totalorder %s162, %s176
      %p178 = scmp.eq.s32.totalorder %s26, 0
      %p179 = por %p177, %p178
      %s181 = sadd.s32 %s180, 1
      %p184 = scmp.eq.s32.totalorder %s20, 1
      %p185 = scmp.ne.s32.totalorder %s180, %s182
      %p186 = scmp.eq.s32.totalorder %s20, 0
      %p187 = por %p185, %p186
      %p188 = scmp.ne.s32.totalorder %s180, %s182
      %p189 = scmp.eq.s32.totalorder %s25, 1
      %p190 = por %p188, %p189
      %p191 = scmp.ne.s32.totalorder %s182, %s183
      %p192 = scmp.eq.s32.totalorder %s25, 0
      %p193 = por %p191, %p192
      %p194 = scmp.ne.s32.totalorder %s182, %s183
      %p195 = scmp.eq.s32.totalorder %s26, 1
      %p196 = por %p194, %p195
      %p198 = scmp.ne.s32.totalorder %s183, %s197
      %p199 = scmp.eq.s32.totalorder %s26, 0
      %p200 = por %p198, %p199
      %s202 = sadd.s32 %s201, 1
      %p205 = scmp.eq.s32.totalorder %s20, 1
      %p206 = scmp.ne.s32.totalorder %s201, %s203
      %p207 = scmp.eq.s32.totalorder %s20, 0
      %p208 = por %p206, %p207
      %p209 = scmp.ne.s32.totalorder %s201, %s203
      %p210 = scmp.eq.s32.totalorder %s25, 1
      %p211 = por %p209, %p210
      %p212 = scmp.ne.s32.totalorder %s203, %s204
      %p213 = scmp.eq.s32.totalorder %s25, 0
      %p214 = por %p212, %p213
      %p215 = scmp.ne.s32.totalorder %s203, %s204
      %p216 = scmp.eq.s32.totalorder %s26, 1
      %p217 = por %p215, %p216
      %p219 = scmp.ne.s32.totalorder %s204, %s218
      %p220 = scmp.eq.s32.totalorder %s26, 0
      %p221 = por %p219, %p220
      %s222 = ssub.s32 %s20, %s27
      %p223 = scmp.eq.s32.totalorder %s222, 0
      %s225 = sadd.s32 %s224, 1
      %s226 = scalar_select %p223, %s224, %s225
      %p229 = pneg %p223
      %p230 = scmp.eq.s32.totalorder %s20, 1
      %p231 = por %p229, %p230
      %p232 = scmp.ne.s32.totalorder %s224, %s227
      %p233 = scmp.eq.s32.totalorder %s20, 0
      %p234 = por %p232, %p233
      %p235 = scmp.ne.s32.totalorder %s224, %s227
      %p236 = scmp.eq.s32.totalorder %s25, 1
      %p237 = por %p235, %p236
      %p238 = scmp.ne.s32.totalorder %s227, %s228
      %p239 = scmp.eq.s32.totalorder %s25, 0
      %p240 = por %p238, %p239
      %p241 = scmp.ne.s32.totalorder %s227, %s228
      %p242 = scmp.eq.s32.totalorder %s26, 1
      %p243 = por %p241, %p242
      %p245 = scmp.ne.s32.totalorder %s228, %s244
      %p246 = scmp.eq.s32.totalorder %s26, 0
      %p247 = por %p245, %p246
      %p248 = scmp.le.s32.totalorder 1, %s20
      %p249 = scmp.lt.s32.totalorder %s20, 3
      %p250 = pnand %p248, %p249
      %p251 = pneg %p250
      // Predicated region
      $region9: #{conv_block_forward.1} parent=5 // pred_check
        _
      $region10: #{conv_block_forward.1} parent=5 // pred_check_branch
        %253 = sbr.rel (%p250) target = $region12
      $region11: #{conv_block_forward.1} parent=5 // pred_region
        %s254 = ssub.s32 %s20, 1
        // Predicated region
        $region13: #{conv_block_forward.1} parent=11 // pred_check
          %p255 = pneg %p67
        $region14: #{conv_block_forward.1} parent=11 // pred_check_branch
          %257 = sbr.rel (%p255) target = $region16
        $region15: #{conv_block_forward.1} parent=11 // pred_region
          %259 = vsyncadd [#allocation8], 0
          %s260 = sshll.u32 %s1, 4
          %s261 = int_to_ptr.hbm [resolvable:$true] %s260
          %s262 = sshll.u32 [#allocation7], 4
          %s263 = int_to_ptr.vmem [resolvable:$true] %s262
          %268 = dma.hbm_to_vmem [thread:$0]  %s261, 1152, %s263, [#allocation8], 128, 128, 8
        $region16: #{conv_block_forward.1} parent=11 // pred_fallthru
          _
        // Predicated region
        $region17: #{conv_block_forward.1} parent=11 // pred_check
          %p269 = pneg %p88
        $region18: #{conv_block_forward.1} parent=11 // pred_check_branch
          %271 = sbr.rel (%p269) target = $region20
        $region19: #{conv_block_forward.1} parent=11 // pred_region
          _
        $region20: #{conv_block_forward.1} parent=11 // pred_fallthru
          _
        // Predicated region
        $region21: #{conv_block_forward.1} parent=11 // pred_check
          %p272 = pneg %p109
        $region22: #{conv_block_forward.1} parent=11 // pred_check_branch
          %274 = sbr.rel (%p272) target = $region24
        $region23: #{conv_block_forward.1} parent=11 // pred_region
          %276 = vsyncadd [#allocation8], 0
          %s277 = sshll.u32 %s3, 4
          %s278 = int_to_ptr.hbm [resolvable:$true] %s277
          %s279 = sshll.u32 [#allocation9], 4
          %s280 = int_to_ptr.vmem [resolvable:$true] %s279
          %285 = dma.hbm_to_vmem [thread:$0]  %s278, 6912, %s280, [#allocation8], 128, 128, 8
        $region24: #{conv_block_forward.1} parent=11 // pred_fallthru
          _
        // Predicated region
        $region25: #{conv_block_forward.1} parent=11 // pred_check
          %p286 = pneg %p130
        $region26: #{conv_block_forward.1} parent=11 // pred_check_branch
          %288 = sbr.rel (%p286) target = $region28
        $region27: #{conv_block_forward.1} parent=11 // pred_region
          _
        $region28: #{conv_block_forward.1} parent=11 // pred_fallthru
          _
        // Predicated region
        $region29: #{conv_block_forward.1} parent=11 // pred_check
          %p289 = pneg %p151
        $region30: #{conv_block_forward.1} parent=11 // pred_check_branch
          %291 = sbr.rel (%p289) target = $region32
        $region31: #{conv_block_forward.1} parent=11 // pred_region
          %293 = vsyncadd [#allocation11], 0
          %s294 = sshll.u32 %s5, 4
          %s295 = int_to_ptr.hbm [resolvable:$true] %s294
          %s296 = sshll.u32 [#allocation10], 4
          %s297 = int_to_ptr.vmem [resolvable:$true] %s296
          %302 = dma.hbm_to_vmem [thread:$0]  %s295, 6912, %s297, [#allocation11], 128, 128, 8
        $region32: #{conv_block_forward.1} parent=11 // pred_fallthru
          _
        // Predicated region
        $region33: #{conv_block_forward.1} parent=11 // pred_check
          %p303 = pneg %p172
        $region34: #{conv_block_forward.1} parent=11 // pred_check_branch
          %305 = sbr.rel (%p303) target = $region36
        $region35: #{conv_block_forward.1} parent=11 // pred_region
          _
        $region36: #{conv_block_forward.1} parent=11 // pred_fallthru
          _
        // Predicated region
        $region37: #{conv_block_forward.1} parent=11 // pred_check
          %p306 = pneg %p193
        $region38: #{conv_block_forward.1} parent=11 // pred_check_branch
          %308 = sbr.rel (%p306) target = $region40
        $region39: #{conv_block_forward.1} parent=11 // pred_region
          %310 = vsyncadd [#allocation11], 0
          %s311 = sshll.u32 %s7, 4
          %s312 = int_to_ptr.hbm [resolvable:$true] %s311
          %s313 = sshll.u32 [#allocation12], 4
          %s314 = int_to_ptr.vmem [resolvable:$true] %s313
          %319 = dma.hbm_to_vmem [thread:$0]  %s312, 6912, %s314, [#allocation11], 128, 128, 8
        $region40: #{conv_block_forward.1} parent=11 // pred_fallthru
          _
        // Predicated region
        $region41: #{conv_block_forward.1} parent=11 // pred_check
          %p320 = pneg %p214
        $region42: #{conv_block_forward.1} parent=11 // pred_check_branch
          %322 = sbr.rel (%p320) target = $region44
        $region43: #{conv_block_forward.1} parent=11 // pred_region
          _
        $region44: #{conv_block_forward.1} parent=11 // pred_fallthru
          _
      $region12: #{conv_block_forward.1} parent=5 // pred_fallthru
        _
      %p323 = scmp.lt.s32.totalorder %s20, 2
      // Predicated region
      $region45: #{conv_block_forward.1} parent=5 // pred_check
        %p324 = pneg %p323
      $region46: #{conv_block_forward.1} parent=5 // pred_check_branch
        %326 = sbr.rel (%p324) target = $region48
      $region47: #{conv_block_forward.1} parent=5 // pred_region
        // Predicated region
        $region49: #{conv_block_forward.1} parent=47 // pred_check
          %p327 = pneg %p40
        $region50: #{conv_block_forward.1} parent=47 // pred_check_branch
          %329 = sbr.rel (%p327) target = $region52
        $region51: #{conv_block_forward.1} parent=47 // pred_region
          %s330 = sand.u32 %s30, 1
          %s331 = scalar_lea.sflag [#allocation6], %s330
          %s332 = sand.u32 %s30, 1
          %s333 = smul.addr %s332, 16
          %s334 = scalar_lea.vmem [#allocation5], %s333
          %336 = vsyncadd %s331, 0
          %s337 = smul.addr %s20, 2
          %s338 = smul.addr %s337, 8
          %s339 = scalar_lea.hbm %s0, %s338
          %s340 = sshll.u32 %s339, 4
          %s341 = int_to_ptr.hbm [resolvable:$true] %s340
          %s342 = sshll.u32 %s334, 4
          %s343 = int_to_ptr.vmem [resolvable:$true] %s342
          %348 = dma.hbm_to_vmem [thread:$0]  %s341, 256, %s343, %s331, 128, 128, 8
        $region52: #{conv_block_forward.1} parent=47 // pred_fallthru
          _
      $region48: #{conv_block_forward.1} parent=5 // pred_fallthru
        _
      %p349 = scmp.le.s32.totalorder 1, %s20
      %p350 = scmp.lt.s32.totalorder %s20, 3
      %p351 = pnand %p349, %p350
      %p352 = pneg %p351
      // Predicated region
      $region53: #{conv_block_forward.1} parent=5 // pred_check
        _
      $region54: #{conv_block_forward.1} parent=5 // pred_check_branch
        %354 = sbr.rel (%p351) target = $region56
      $region55: #{conv_block_forward.1} parent=5 // pred_region
        %s355 = ssub.s32 %s20, 1
        %s356 = sand.u32 %s33, 1
        %s357 = scalar_lea.sflag [#allocation6], %s356
        %s358 = sand.u32 %s33, 1
        %s359 = smul.addr %s358, 16
        %s360 = scalar_lea.vmem [#allocation5], %s359
        // Predicated region
        $region57: #{conv_block_forward.1} parent=55 // pred_check
          %p361 = pneg %p46
        $region58: #{conv_block_forward.1} parent=55 // pred_check_branch
          %363 = sbr.rel (%p361) target = $region60
        $region59: #{conv_block_forward.1} parent=55 // pred_region
          %365 = dma.done %s357, 256
        $region60: #{conv_block_forward.1} parent=55 // pred_fallthru
          _
        // Predicated region
        $region61: #{conv_block_forward.1} parent=55 // pred_check
          %p366 = pneg %p67
        $region62: #{conv_block_forward.1} parent=55 // pred_check_branch
          %368 = sbr.rel (%p366) target = $region64
        $region63: #{conv_block_forward.1} parent=55 // pred_region
          %370 = dma.done [#allocation8], 1152
        $region64: #{conv_block_forward.1} parent=55 // pred_fallthru
          _
        // Predicated region
        $region65: #{conv_block_forward.1} parent=55 // pred_check
          %p371 = pneg %p109
        $region66: #{conv_block_forward.1} parent=55 // pred_check_branch
          %373 = sbr.rel (%p371) target = $region68
        $region67: #{conv_block_forward.1} parent=55 // pred_region
          %375 = dma.done [#allocation8], 6912
        $region68: #{conv_block_forward.1} parent=55 // pred_fallthru
          _
        // Predicated region
        $region69: #{conv_block_forward.1} parent=55 // pred_check
          %p376 = pneg %p151
        $region70: #{conv_block_forward.1} parent=55 // pred_check_branch
          %378 = sbr.rel (%p376) target = $region72
        $region71: #{conv_block_forward.1} parent=55 // pred_region
          %380 = dma.done [#allocation11], 6912
        $region72: #{conv_block_forward.1} parent=55 // pred_fallthru
          _
        // Predicated region
        $region73: #{conv_block_forward.1} parent=55 // pred_check
          %p381 = pneg %p193
        $region74: #{conv_block_forward.1} parent=55 // pred_check_branch
          %383 = sbr.rel (%p381) target = $region76
        $region75: #{conv_block_forward.1} parent=55 // pred_region
          %385 = dma.done [#allocation11], 6912
        $region76: #{conv_block_forward.1} parent=55 // pred_fallthru
          _
        %s386 = sand.u32 %s33, 1
        %s387 = scalar_lea.sflag [#allocation6], %s386
        %s388 = sand.u32 %s33, 1
        %s389 = smul.addr %s388, 16
        %s390 = scalar_lea.vmem [#allocation5], %s389
        %p391 = pneg %p46
        %p392 = pneg %p43
        %p393 = pneg %p67
        %p394 = pneg %p64
        %p395 = pneg %p88
        %p396 = pneg %p85
        %p397 = pneg %p109
        %p398 = pneg %p106
        %p399 = pneg %p130
        %p400 = pneg %p127
        %p401 = pneg %p151
        %p402 = pneg %p148
        %p403 = pneg %p172
        %p404 = pneg %p169
        %p405 = pneg %p193
        %p406 = pneg %p190
        %p407 = pneg %p214
        %p408 = pneg %p211
        %p409 = pneg %p240
        %p410 = pneg %p237
        %p411 = scmp.lt.s32.totalorder %s25, 1
        %s412 = scalar_select %p411, %s25, 1
        %s413 = smul.addr %s412, 2
        %s414 = smul.addr %s413, 8
        %s415 = scalar_lea.vmem %s9, %s414
        %p416 = scmp.lt.s32.totalorder %s25, 1
        %s417 = scalar_select %p416, %s25, 1
        %s418 = smul.addr %s417, 2
        %s419 = smul.addr %s418, 8
        %s420 = scalar_lea.vmem %s9, %s419
        %vm421 = vcmask 146432
        %422 = vst.msk [vmem:[#allocation2] sm:$0xff] %vm421, 0.0
        %423 = vst.msk [vmem:[#allocation2 + $0x8] sm:$0xff] %vm421, 0.0
        %vm424 = vcmask 140288
        %425 = vst.msk [vmem:[#allocation2 + $0x10] sm:$0x3] %vm424, 0.0
        %426 = vst [vmem:[#allocation3] sm:$0xff] 0.0
        %vm427 = vcmask 130048
        %428 = vst.msk [vmem:[#allocation3 + $0x8] sm:$0xff] %vm427, 0.0
        %429 = vst [vmem:[#allocation3 + $0x10] sm:$0xff] 0.0
        %430 = vst.msk [vmem:[#allocation3 + $0x18] sm:$0xff] %vm427, 0.0
        %431 = vst [vmem:[#allocation3 + $0x20] sm:$0x3] 0.0
        %vm432 = vcmask 123904
        %433 = vst.msk [vmem:[#allocation3 + $0x28] sm:$0x3] %vm432, 0.0
        %434 = vst [vmem:[#allocation4] sm:$0xff] 0.0
        %435 = vst.msk [vmem:[#allocation4 + $0x8] sm:$0xff] %vm427, 0.0
        %436 = vst [vmem:[#allocation4 + $0x10] sm:$0xff] 0.0
        %437 = vst.msk [vmem:[#allocation4 + $0x18] sm:$0xff] %vm427, 0.0
        %438 = vst [vmem:[#allocation4 + $0x20] sm:$0x3] 0.0
        %439 = vst.msk [vmem:[#allocation4 + $0x28] sm:$0x3] %vm432, 0.0
        %v440 = vld [vmem:[%s360] sm:$0xff]
        %v441 = vld [vmem:[%s360 + $0x8] sm:$0xff]
        %442 = vst.msk [vmem:[#allocation2 + $0x1] sm:$0xff] %vm427, %v440
        %443 = vst.msk [vmem:[#allocation2 + $0x9] sm:$0xff] %vm427, %v441
        %v444 = vld [vmem:[#allocation2] sm:$0xff]
        %v445 = vld [vmem:[#allocation2 + $0x8] sm:$0xff]
        %v446 = vld [vmem:[#allocation7] sm:$0xff]
        %v447 = vld [vmem:[#allocation7 + $0x8] sm:$0xff]
        %v448 = vld [vmem:[#allocation7 + $0x10] sm:$0x3]
        %v449 = vld [vmem:[#allocation2 + $0x1] sm:$0xff]
        %v450 = vld [vmem:[#allocation2 + $0x9] sm:$0xff]
        %s451 = scalar_lea.vmem [#allocation7], 24
        %v452 = vld [vmem:[%s451] sm:$0xff]
        %v453 = vld [vmem:[%s451 + $0x8] sm:$0xff]
        %v454 = vld [vmem:[%s451 + $0x10] sm:$0x3]
        %v456 = vsel %vm421, %v449, 0
        %v459 = vsel %vm421, %v450, 0
        %vm461 = vcmask 1041408
        %v463 = vsel %vm461, %v454, 0
        %465 = vmatpush.msra.mxu0 0.0
        %466 = vmatpush.msra.mxu0 0.0
        %467 = vmatpush.msra.mxu0 0.0
        %468 = vmatpush.msra.mxu0 0.0
        %469 = vmatpush.msra.mxu0 0.0
        %470 = vmatpush.msra.mxu0 0.0
        %471 = vmatpush.msra.mxu0 0.0
        %472 = vmatpush.msra.mxu0 0.0
        %473 = vmatpush.msra.mxu0 0.0
        %474 = vmatpush.msra.mxu0 0.0
        %475 = vmatpush.msra.mxu0 0.0
        %476 = vmatpush.msra.mxu0 0.0
        %477 = vmatpush.msra.mxu0 0.0
        %478 = vmatpush.msra.mxu0 %v463
        %479 = vmatpush.msra.mxu0 %v453
        %480 = vmatpush.msra.mxu0 %v452
        %481 = vmatmul.f32.gmra.mxu0 %v456
        %v482 = vpop.f32.mrf.mxu0
        %v483 = vadd.f32 0.0, %v482
        %484 = vmatmul.f32.gmra.mxu0 %v459
        %v485 = vpop.f32.mrf.mxu0
        %v486 = vadd.f32 0.0, %v485
        %487 = vdwg.mxu0
        %v489 = vsel %vm421, %v444, 0
        %v492 = vsel %vm421, %v445, 0
        %v495 = vsel %vm461, %v448, 0
        %497 = vmatpush.msra.mxu0 0.0
        %498 = vmatpush.msra.mxu0 0.0
        %499 = vmatpush.msra.mxu0 0.0
        %500 = vmatpush.msra.mxu0 0.0
        %501 = vmatpush.msra.mxu0 0.0
        %502 = vmatpush.msra.mxu0 0.0
        %503 = vmatpush.msra.mxu0 0.0
        %504 = vmatpush.msra.mxu0 0.0
        %505 = vmatpush.msra.mxu0 0.0
        %506 = vmatpush.msra.mxu0 0.0
        %507 = vmatpush.msra.mxu0 0.0
        %508 = vmatpush.msra.mxu0 0.0
        %509 = vmatpush.msra.mxu0 0.0
        %510 = vmatpush.msra.mxu0 %v495
        %511 = vmatpush.msra.mxu0 %v447
        %512 = vmatpush.msra.mxu0 %v446
        %513 = vmatmul.f32.gmra.mxu0 %v489
        %v514 = vpop.f32.mrf.mxu0
        %v515 = vadd.f32 %v483, %v514
        %516 = vmatmul.f32.gmra.mxu0 %v492
        %v517 = vpop.f32.mrf.mxu0
        %v518 = vadd.f32 %v486, %v517
        %519 = vdwg.mxu0
        %v520 = vld [vmem:[#allocation2 + $0x2] sm:$0xff]
        %v521 = vld [vmem:[#allocation2 + $0xa] sm:$0xff]
        %s522 = scalar_lea.vmem [#allocation7], 48
        %v523 = vld [vmem:[%s522] sm:$0xff]
        %v524 = vld [vmem:[%s522 + $0x8] sm:$0xff]
        %v525 = vld [vmem:[%s522 + $0x10] sm:$0x3]
        %v527 = vsel %vm421, %v520, 0
        %v530 = vsel %vm421, %v521, 0
        %v533 = vsel %vm461, %v525, 0
        %535 = vmatpush.msra.mxu0 0.0
        %536 = vmatpush.msra.mxu0 0.0
        %537 = vmatpush.msra.mxu0 0.0
        %538 = vmatpush.msra.mxu0 0.0
        %539 = vmatpush.msra.mxu0 0.0
        %540 = vmatpush.msra.mxu0 0.0
        %541 = vmatpush.msra.mxu0 0.0
        %542 = vmatpush.msra.mxu0 0.0
        %543 = vmatpush.msra.mxu0 0.0
        %544 = vmatpush.msra.mxu0 0.0
        %545 = vmatpush.msra.mxu0 0.0
        %546 = vmatpush.msra.mxu0 0.0
        %547 = vmatpush.msra.mxu0 0.0
        %548 = vmatpush.msra.mxu0 %v533
        %549 = vmatpush.msra.mxu0 %v524
        %550 = vmatpush.msra.mxu0 %v523
        %551 = vmatmul.f32.gmra.mxu0 %v527
        %v552 = vpop.f32.mrf.mxu0
        %v553 = vadd.f32 0.0, %v552
        %554 = vmatmul.f32.gmra.mxu0 %v530
        %v555 = vpop.f32.mrf.mxu0
        %v556 = vadd.f32 0.0, %v555
        %557 = vdwg.mxu0
        %v558 = vadd.f32 %v515, %v553
        %v559 = vadd.f32 %v518, %v556
        %v560 = vld [vmem:[%s2] sm:$0x1]
        %v562 = vperm.slane %v560, 0
        %v564 = vadd.f32 %v558, %v562
        %v565 = vadd.f32 %v559, %v562
        %v566 = vmax.f32 %v564, 0.0
        %v567 = vmax.f32 %v565, 0.0
        %vm570 = vcmask 1040384
        %v571 = vrot.slane %v566, 7
        %v572 = vrot.slane %v567, 7
        %v573 = vsel %vm570, %v571, %v572
        %577 = vst [vmem:[#allocation3] sm:$0xfe] %v571
        %578 = vst [vmem:[#allocation3 + $0x10] sm:$0xff] %v573
        %579 = vst [vmem:[#allocation3 + $0x20] sm:$0x1] %v572
        %v580 = vld [vmem:[#allocation3] sm:$0xff]
        %v581 = vld [vmem:[#allocation3 + $0x8] sm:$0xff]
        %v582 = vld [vmem:[#allocation3 + $0x10] sm:$0xff]
        %v583 = vld [vmem:[#allocation3 + $0x18] sm:$0xff]
        %v584 = vld [vmem:[#allocation9] sm:$0xff]
        %v585 = vld [vmem:[#allocation9 + $0x8] sm:$0xff]
        %v586 = vld [vmem:[#allocation9 + $0x10] sm:$0xff]
        %v587 = vld [vmem:[#allocation9 + $0x18] sm:$0xff]
        %v588 = vld [vmem:[#allocation9 + $0x20] sm:$0xff]
        %v589 = vld [vmem:[#allocation9 + $0x28] sm:$0xff]
        %v590 = vld [vmem:[#allocation9 + $0x30] sm:$0xff]
        %v591 = vld [vmem:[#allocation9 + $0x38] sm:$0xff]
        %v592 = vld [vmem:[#allocation9 + $0x40] sm:$0xff]
        %v593 = vld [vmem:[#allocation9 + $0x48] sm:$0xff]
        %v594 = vld [vmem:[#allocation9 + $0x50] sm:$0xff]
        %v595 = vld [vmem:[#allocation9 + $0x58] sm:$0xff]
        %v596 = vld [vmem:[#allocation9 + $0x60] sm:$0xff]
        %v597 = vld [vmem:[#allocation9 + $0x68] sm:$0xff]
        %v598 = vld [vmem:[#allocation9 + $0x70] sm:$0xff]
        %v599 = vld [vmem:[#allocation9 + $0x78] sm:$0xff]
        %v600 = vld [vmem:[#allocation9 + $0x80] sm:$0xff]
        %v601 = vld [vmem:[#allocation9 + $0x88] sm:$0xff]
        %v602 = vld [vmem:[#allocation3] sm:$0xfe]
        %v603 = vld [vmem:[#allocation3 + $0x8] sm:$0xfe]
        %v604 = vld [vmem:[#allocation3 + $0x20] sm:$0x1]
        %v605 = vld [vmem:[#allocation3 + $0x28] sm:$0x1]
        %s606 = scalar_lea.vmem [#allocation9], 144
        %v607 = vld [vmem:[%s606] sm:$0xff]
        %v608 = vld [vmem:[%s606 + $0x8] sm:$0xff]
        %v609 = vld [vmem:[%s606 + $0x10] sm:$0xff]
        %v610 = vld [vmem:[%s606 + $0x18] sm:$0xff]
        %v611 = vld [vmem:[%s606 + $0x20] sm:$0xff]
        %v612 = vld [vmem:[%s606 + $0x28] sm:$0xff]
        %v613 = vld [vmem:[%s606 + $0x30] sm:$0xff]
        %v614 = vld [vmem:[%s606 + $0x38] sm:$0xff]
        %v615 = vld [vmem:[%s606 + $0x40] sm:$0xff]
        %v616 = vld [vmem:[%s606 + $0x48] sm:$0xff]
        %v617 = vld [vmem:[%s606 + $0x50] sm:$0xff]
        %v618 = vld [vmem:[%s606 + $0x58] sm:$0xff]
        %v619 = vld [vmem:[%s606 + $0x60] sm:$0xff]
        %v620 = vld [vmem:[%s606 + $0x68] sm:$0xff]
        %v621 = vld [vmem:[%s606 + $0x70] sm:$0xff]
        %v622 = vld [vmem:[%s606 + $0x78] sm:$0xff]
        %v623 = vld [vmem:[%s606 + $0x80] sm:$0xff]
        %v624 = vld [vmem:[%s606 + $0x88] sm:$0xff]
        %vm631 = vcmask 1046528
        %v632 = vrot.slane %v602, 1
        %v633 = vrot.slane %v582, 1
        %v634 = vsel %vm631, %v632, %v633
        %v635 = vrot.slane %v603, 1
        %v636 = vrot.slane %v583, 1
        %v637 = vsel %vm631, %v635, %v636
        %v638 = vrot.slane %v604, 1
        %v639 = vsel %vm631, %v633, %v638
        %v640 = vrot.slane %v605, 1
        %v641 = vsel %vm631, %v636, %v640
        %v644 = vsel %vm427, %v637, 0
        %v646 = vsel %vm427, %v641, 0
        %648 = vmatpush.msra.mxu0 %v622
        %649 = vmatpush.msra.mxu0 %v621
        %650 = vmatpush.msra.mxu0 %v620
        %651 = vmatpush.msra.mxu0 %v619
        %652 = vmatpush.msra.mxu0 %v618
        %653 = vmatpush.msra.mxu0 %v617
        %654 = vmatpush.msra.mxu0 %v616
        %655 = vmatpush.msra.mxu0 %v615
        %656 = vmatpush.msra.mxu0 %v614
        %657 = vmatpush.msra.mxu0 %v613
        %658 = vmatpush.msra.mxu0 %v612
        %659 = vmatpush.msra.mxu0 %v611
        %660 = vmatpush.msra.mxu0 %v610
        %661 = vmatpush.msra.mxu0 %v609
        %662 = vmatpush.msra.mxu0 %v608
        %663 = vmatpush.msra.mxu0 %v607
        %664 = vmatmul.f32.gmra.mxu0 %v634
        %v665 = vpop.f32.mrf.mxu0
        %v666 = vadd.f32 0.0, %v665
        %667 = vmatmul.f32.gmra.mxu0 %v639
        %v668 = vpop.f32.mrf.mxu0
        %v669 = vadd.f32 0.0, %v668
        %670 = vdwg.mxu0
        %671 = vmatpush.msra.mxu0 0.0
        %672 = vmatpush.msra.mxu0 0.0
        %673 = vmatpush.msra.mxu0 0.0
        %674 = vmatpush.msra.mxu0 0.0
        %675 = vmatpush.msra.mxu0 0.0
        %676 = vmatpush.msra.mxu0 0.0
        %677 = vmatpush.msra.mxu0 0.0
        %678 = vmatpush.msra.mxu0 0.0
        %679 = vmatpush.msra.mxu0 0.0
        %680 = vmatpush.msra.mxu0 0.0
        %681 = vmatpush.msra.mxu0 0.0
        %682 = vmatpush.msra.mxu0 0.0
        %683 = vmatpush.msra.mxu0 0.0
        %684 = vmatpush.msra.mxu0 0.0
        %685 = vmatpush.msra.mxu0 %v624
        %686 = vmatpush.msra.mxu0 %v623
        %687 = vmatmul.f32.gmra.mxu0 %v644
        %v688 = vpop.f32.mrf.mxu0
        %v689 = vadd.f32 %v666, %v688
        %690 = vmatmul.f32.gmra.mxu0 %v646
        %v691 = vpop.f32.mrf.mxu0
        %v692 = vadd.f32 %v669, %v691
        %693 = vdwg.mxu0
        %v695 = vsel %vm427, %v581, 0
        %v697 = vsel %vm427, %v583, 0
        %699 = vmatpush.msra.mxu0 %v599
        %700 = vmatpush.msra.mxu0 %v598
        %701 = vmatpush.msra.mxu0 %v597
        %702 = vmatpush.msra.mxu0 %v596
        %703 = vmatpush.msra.mxu0 %v595
        %704 = vmatpush.msra.mxu0 %v594
        %705 = vmatpush.msra.mxu0 %v593
        %706 = vmatpush.msra.mxu0 %v592
        %707 = vmatpush.msra.mxu0 %v591
        %708 = vmatpush.msra.mxu0 %v590
        %709 = vmatpush.msra.mxu0 %v589
        %710 = vmatpush.msra.mxu0 %v588
        %711 = vmatpush.msra.mxu0 %v587
        %712 = vmatpush.msra.mxu0 %v586
        %713 = vmatpush.msra.mxu0 %v585
        %714 = vmatpush.msra.mxu0 %v584
        %715 = vmatmul.f32.gmra.mxu0 %v580
        %v716 = vpop.f32.mrf.mxu0
        %v717 = vadd.f32 %v689, %v716
        %718 = vmatmul.f32.gmra.mxu0 %v582
        %v719 = vpop.f32.mrf.mxu0
        %v720 = vadd.f32 %v692, %v719
        %721 = vdwg.mxu0
        %722 = vmatpush.msra.mxu0 0.0
        %723 = vmatpush.msra.mxu0 0.0
        %724 = vmatpush.msra.mxu0 0.0
        %725 = vmatpush.msra.mxu0 0.0
        %726 = vmatpush.msra.mxu0 0.0
        %727 = vmatpush.msra.mxu0 0.0
        %728 = vmatpush.msra.mxu0 0.0
        %729 = vmatpush.msra.mxu0 0.0
        %730 = vmatpush.msra.mxu0 0.0
        %731 = vmatpush.msra.mxu0 0.0
        %732 = vmatpush.msra.mxu0 0.0
        %733 = vmatpush.msra.mxu0 0.0
        %734 = vmatpush.msra.mxu0 0.0
        %735 = vmatpush.msra.mxu0 0.0
        %736 = vmatpush.msra.mxu0 %v601
        %737 = vmatpush.msra.mxu0 %v600
        %738 = vmatmul.f32.gmra.mxu0 %v695
        %v739 = vpop.f32.mrf.mxu0
        %v740 = vadd.f32 %v717, %v739
        %741 = vmatmul.f32.gmra.mxu0 %v697
        %v742 = vpop.f32.mrf.mxu0
        %v743 = vadd.f32 %v720, %v742
        %744 = vdwg.mxu0
        %v745 = vld [vmem:[#allocation3] sm:$0xfc]
        %v746 = vld [vmem:[#allocation3 + $0x8] sm:$0xfc]
        %v747 = vld [vmem:[#allocation3 + $0x20] sm:$0x3]
        %v748 = vld [vmem:[#allocation3 + $0x28] sm:$0x3]
        %s749 = scalar_lea.vmem [#allocation9], 288
        %v750 = vld [vmem:[%s749] sm:$0xff]
        %v751 = vld [vmem:[%s749 + $0x8] sm:$0xff]
        %v752 = vld [vmem:[%s749 + $0x10] sm:$0xff]
        %v753 = vld [vmem:[%s749 + $0x18] sm:$0xff]
        %v754 = vld [vmem:[%s749 + $0x20] sm:$0xff]
        %v755 = vld [vmem:[%s749 + $0x28] sm:$0xff]
        %v756 = vld [vmem:[%s749 + $0x30] sm:$0xff]
        %v757 = vld [vmem:[%s749 + $0x38] sm:$0xff]
        %v758 = vld [vmem:[%s749 + $0x40] sm:$0xff]
        %v759 = vld [vmem:[%s749 + $0x48] sm:$0xff]
        %v760 = vld [vmem:[%s749 + $0x50] sm:$0xff]
        %v761 = vld [vmem:[%s749 + $0x58] sm:$0xff]
        %v762 = vld [vmem:[%s749 + $0x60] sm:$0xff]
        %v763 = vld [vmem:[%s749 + $0x68] sm:$0xff]
        %v764 = vld [vmem:[%s749 + $0x70] sm:$0xff]
        %v765 = vld [vmem:[%s749 + $0x78] sm:$0xff]
        %v766 = vld [vmem:[%s749 + $0x80] sm:$0xff]
        %v767 = vld [vmem:[%s749 + $0x88] sm:$0xff]
        %vm772 = vcmask 1045504
        %v773 = vrot.slane %v745, 2
        %v774 = vrot.slane %v582, 2
        %v775 = vsel %vm772, %v773, %v774
        %v776 = vrot.slane %v746, 2
        %v777 = vrot.slane %v583, 2
        %v778 = vsel %vm772, %v776, %v777
        %v779 = vrot.slane %v747, 2
        %v780 = vsel %vm772, %v774, %v779
        %v781 = vrot.slane %v748, 2
        %v782 = vsel %vm772, %v777, %v781
        %v785 = vsel %vm427, %v778, 0
        %v787 = vsel %vm427, %v782, 0
        %789 = vmatpush.msra.mxu0 %v765
        %790 = vmatpush.msra.mxu0 %v764
        %791 = vmatpush.msra.mxu0 %v763
        %792 = vmatpush.msra.mxu0 %v762
        %793 = vmatpush.msra.mxu0 %v761
        %794 = vmatpush.msra.mxu0 %v760
        %795 = vmatpush.msra.mxu0 %v759
        %796 = vmatpush.msra.mxu0 %v758
        %797 = vmatpush.msra.mxu0 %v757
        %798 = vmatpush.msra.mxu0 %v756
        %799 = vmatpush.msra.mxu0 %v755
        %800 = vmatpush.msra.mxu0 %v754
        %801 = vmatpush.msra.mxu0 %v753
        %802 = vmatpush.msra.mxu0 %v752
        %803 = vmatpush.msra.mxu0 %v751
        %804 = vmatpush.msra.mxu0 %v750
        %805 = vmatmul.f32.gmra.mxu0 %v775
        %v806 = vpop.f32.mrf.mxu0
        %v807 = vadd.f32 0.0, %v806
        %808 = vmatmul.f32.gmra.mxu0 %v780
        %v809 = vpop.f32.mrf.mxu0
        %v810 = vadd.f32 0.0, %v809
        %811 = vdwg.mxu0
        %812 = vmatpush.msra.mxu0 0.0
        %813 = vmatpush.msra.mxu0 0.0
        %814 = vmatpush.msra.mxu0 0.0
        %815 = vmatpush.msra.mxu0 0.0
        %816 = vmatpush.msra.mxu0 0.0
        %817 = vmatpush.msra.mxu0 0.0
        %818 = vmatpush.msra.mxu0 0.0
        %819 = vmatpush.msra.mxu0 0.0
        %820 = vmatpush.msra.mxu0 0.0
        %821 = vmatpush.msra.mxu0 0.0
        %822 = vmatpush.msra.mxu0 0.0
        %823 = vmatpush.msra.mxu0 0.0
        %824 = vmatpush.msra.mxu0 0.0
        %825 = vmatpush.msra.mxu0 0.0
        %826 = vmatpush.msra.mxu0 %v767
        %827 = vmatpush.msra.mxu0 %v766
        %828 = vmatmul.f32.gmra.mxu0 %v785
        %v829 = vpop.f32.mrf.mxu0
        %v830 = vadd.f32 %v807, %v829
        %831 = vmatmul.f32.gmra.mxu0 %v787
        %v832 = vpop.f32.mrf.mxu0
        %v833 = vadd.f32 %v810, %v832
        %834 = vdwg.mxu0
        %v835 = vadd.f32 %v740, %v830
        %v836 = vadd.f32 %v743, %v833
        %v837 = vld [vmem:[%s4] sm:$0x1]
        %v839 = vperm.slane %v837, 0
        %v841 = vadd.f32 %v835, %v839
        %v842 = vadd.f32 %v836, %v839
        %v843 = vmax.f32 %v841, 0.0
        %v844 = vmax.f32 %v842, 0.0
        %v847 = vrot.slane %v843, 7
        %v848 = vrot.slane %v844, 7
        %v849 = vsel %vm570, %v847, %v848
        %853 = vst [vmem:[#allocation4] sm:$0xfe] %v847
        %854 = vst [vmem:[#allocation4 + $0x10] sm:$0xff] %v849
        %855 = vst [vmem:[#allocation4 + $0x20] sm:$0x1] %v848
        %v856 = vld [vmem:[#allocation4] sm:$0xff]
        %v857 = vld [vmem:[#allocation4 + $0x8] sm:$0xff]
        %v858 = vld [vmem:[#allocation4 + $0x10] sm:$0xff]
        %v859 = vld [vmem:[#allocation4 + $0x18] sm:$0xff]
        %v860 = vld [vmem:[#allocation10] sm:$0xff]
        %v861 = vld [vmem:[#allocation10 + $0x8] sm:$0xff]
        %v862 = vld [vmem:[#allocation10 + $0x10] sm:$0xff]
        %v863 = vld [vmem:[#allocation10 + $0x18] sm:$0xff]
        %v864 = vld [vmem:[#allocation10 + $0x20] sm:$0xff]
        %v865 = vld [vmem:[#allocation10 + $0x28] sm:$0xff]
        %v866 = vld [vmem:[#allocation10 + $0x30] sm:$0xff]
        %v867 = vld [vmem:[#allocation10 + $0x38] sm:$0xff]
        %v868 = vld [vmem:[#allocation10 + $0x40] sm:$0xff]
        %v869 = vld [vmem:[#allocation10 + $0x48] sm:$0xff]
        %v870 = vld [vmem:[#allocation10 + $0x50] sm:$0xff]
        %v871 = vld [vmem:[#allocation10 + $0x58] sm:$0xff]
        %v872 = vld [vmem:[#allocation10 + $0x60] sm:$0xff]
        %v873 = vld [vmem:[#allocation10 + $0x68] sm:$0xff]
        %v874 = vld [vmem:[#allocation10 + $0x70] sm:$0xff]
        %v875 = vld [vmem:[#allocation10 + $0x78] sm:$0xff]
        %v876 = vld [vmem:[#allocation10 + $0x80] sm:$0xff]
        %v877 = vld [vmem:[#allocation10 + $0x88] sm:$0xff]
        %v878 = vld [vmem:[#allocation4] sm:$0xfe]
        %v879 = vld [vmem:[#allocation4 + $0x8] sm:$0xfe]
        %v880 = vld [vmem:[#allocation4 + $0x20] sm:$0x1]
        %v881 = vld [vmem:[#allocation4 + $0x28] sm:$0x1]
        %s882 = scalar_lea.vmem [#allocation10], 144
        %v883 = vld [vmem:[%s882] sm:$0xff]
        %v884 = vld [vmem:[%s882 + $0x8] sm:$0xff]
        %v885 = vld [vmem:[%s882 + $0x10] sm:$0xff]
        %v886 = vld [vmem:[%s882 + $0x18] sm:$0xff]
        %v887 = vld [vmem:[%s882 + $0x20] sm:$0xff]
        %v888 = vld [vmem:[%s882 + $0x28] sm:$0xff]
        %v889 = vld [vmem:[%s882 + $0x30] sm:$0xff]
        %v890 = vld [vmem:[%s882 + $0x38] sm:$0xff]
        %v891 = vld [vmem:[%s882 + $0x40] sm:$0xff]
        %v892 = vld [vmem:[%s882 + $0x48] sm:$0xff]
        %v893 = vld [vmem:[%s882 + $0x50] sm:$0xff]
        %v894 = vld [vmem:[%s882 + $0x58] sm:$0xff]
        %v895 = vld [vmem:[%s882 + $0x60] sm:$0xff]
        %v896 = vld [vmem:[%s882 + $0x68] sm:$0xff]
        %v897 = vld [vmem:[%s882 + $0x70] sm:$0xff]
        %v898 = vld [vmem:[%s882 + $0x78] sm:$0xff]
        %v899 = vld [vmem:[%s882 + $0x80] sm:$0xff]
        %v900 = vld [vmem:[%s882 + $0x88] sm:$0xff]
        %v907 = vrot.slane %v878, 1
        %v908 = vrot.slane %v858, 1
        %v909 = vsel %vm631, %v907, %v908
        %v910 = vrot.slane %v879, 1
        %v911 = vrot.slane %v859, 1
        %v912 = vsel %vm631, %v910, %v911
        %v913 = vrot.slane %v880, 1
        %v914 = vsel %vm631, %v908, %v913
        %v915 = vrot.slane %v881, 1
        %v916 = vsel %vm631, %v911, %v915
        %v919 = vsel %vm427, %v912, 0
        %v921 = vsel %vm427, %v916, 0
        %923 = vmatpush.msra.mxu0 %v898
        %924 = vmatpush.msra.mxu0 %v897
        %925 = vmatpush.msra.mxu0 %v896
        %926 = vmatpush.msra.mxu0 %v895
        %927 = vmatpush.msra.mxu0 %v894
        %928 = vmatpush.msra.mxu0 %v893
        %929 = vmatpush.msra.mxu0 %v892
        %930 = vmatpush.msra.mxu0 %v891
        %931 = vmatpush.msra.mxu0 %v890
        %932 = vmatpush.msra.mxu0 %v889
        %933 = vmatpush.msra.mxu0 %v888
        %934 = vmatpush.msra.mxu0 %v887
        %935 = vmatpush.msra.mxu0 %v886
        %936 = vmatpush.msra.mxu0 %v885
        %937 = vmatpush.msra.mxu0 %v884
        %938 = vmatpush.msra.mxu0 %v883
        %939 = vmatmul.f32.gmra.mxu0 %v909
        %v940 = vpop.f32.mrf.mxu0
        %v941 = vadd.f32 0.0, %v940
        %942 = vmatmul.f32.gmra.mxu0 %v914
        %v943 = vpop.f32.mrf.mxu0
        %v944 = vadd.f32 0.0, %v943
        %945 = vdwg.mxu0
        %946 = vmatpush.msra.mxu0 0.0
        %947 = vmatpush.msra.mxu0 0.0
        %948 = vmatpush.msra.mxu0 0.0
        %949 = vmatpush.msra.mxu0 0.0
        %950 = vmatpush.msra.mxu0 0.0
        %951 = vmatpush.msra.mxu0 0.0
        %952 = vmatpush.msra.mxu0 0.0
        %953 = vmatpush.msra.mxu0 0.0
        %954 = vmatpush.msra.mxu0 0.0
        %955 = vmatpush.msra.mxu0 0.0
        %956 = vmatpush.msra.mxu0 0.0
        %957 = vmatpush.msra.mxu0 0.0
        %958 = vmatpush.msra.mxu0 0.0
        %959 = vmatpush.msra.mxu0 0.0
        %960 = vmatpush.msra.mxu0 %v900
        %961 = vmatpush.msra.mxu0 %v899
        %962 = vmatmul.f32.gmra.mxu0 %v919
        %v963 = vpop.f32.mrf.mxu0
        %v964 = vadd.f32 %v941, %v963
        %965 = vmatmul.f32.gmra.mxu0 %v921
        %v966 = vpop.f32.mrf.mxu0
        %v967 = vadd.f32 %v944, %v966
        %968 = vdwg.mxu0
        %v970 = vsel %vm427, %v857, 0
        %v972 = vsel %vm427, %v859, 0
        %974 = vmatpush.msra.mxu0 %v875
        %975 = vmatpush.msra.mxu0 %v874
        %976 = vmatpush.msra.mxu0 %v873
        %977 = vmatpush.msra.mxu0 %v872
        %978 = vmatpush.msra.mxu0 %v871
        %979 = vmatpush.msra.mxu0 %v870
        %980 = vmatpush.msra.mxu0 %v869
        %981 = vmatpush.msra.mxu0 %v868
        %982 = vmatpush.msra.mxu0 %v867
        %983 = vmatpush.msra.mxu0 %v866
        %984 = vmatpush.msra.mxu0 %v865
        %985 = vmatpush.msra.mxu0 %v864
        %986 = vmatpush.msra.mxu0 %v863
        %987 = vmatpush.msra.mxu0 %v862
        %988 = vmatpush.msra.mxu0 %v861
        %989 = vmatpush.msra.mxu0 %v860
        %990 = vmatmul.f32.gmra.mxu0 %v856
        %v991 = vpop.f32.mrf.mxu0
        %v992 = vadd.f32 %v964, %v991
        %993 = vmatmul.f32.gmra.mxu0 %v858
        %v994 = vpop.f32.mrf.mxu0
        %v995 = vadd.f32 %v967, %v994
        %996 = vdwg.mxu0
        %997 = vmatpush.msra.mxu0 0.0
        %998 = vmatpush.msra.mxu0 0.0
        %999 = vmatpush.msra.mxu0 0.0
        %1000 = vmatpush.msra.mxu0 0.0
        %1001 = vmatpush.msra.mxu0 0.0
        %1002 = vmatpush.msra.mxu0 0.0
        %1003 = vmatpush.msra.mxu0 0.0
        %1004 = vmatpush.msra.mxu0 0.0
        %1005 = vmatpush.msra.mxu0 0.0
        %1006 = vmatpush.msra.mxu0 0.0
        %1007 = vmatpush.msra.mxu0 0.0
        %1008 = vmatpush.msra.mxu0 0.0
        %1009 = vmatpush.msra.mxu0 0.0
        %1010 = vmatpush.msra.mxu0 0.0
        %1011 = vmatpush.msra.mxu0 %v877
        %1012 = vmatpush.msra.mxu0 %v876
        %1013 = vmatmul.f32.gmra.mxu0 %v970
        %v1014 = vpop.f32.mrf.mxu0
        %v1015 = vadd.f32 %v992, %v1014
        %1016 = vmatmul.f32.gmra.mxu0 %v972
        %v1017 = vpop.f32.mrf.mxu0
        %v1018 = vadd.f32 %v995, %v1017
        %1019 = vdwg.mxu0
        %v1020 = vld [vmem:[#allocation4] sm:$0xfc]
        %v1021 = vld [vmem:[#allocation4 + $0x8] sm:$0xfc]
        %v1022 = vld [vmem:[#allocation4 + $0x20] sm:$0x3]
        %v1023 = vld [vmem:[#allocation4 + $0x28] sm:$0x3]
        %s1024 = scalar_lea.vmem [#allocation10], 288
        %v1025 = vld [vmem:[%s1024] sm:$0xff]
        %v1026 = vld [vmem:[%s1024 + $0x8] sm:$0xff]
        %v1027 = vld [vmem:[%s1024 + $0x10] sm:$0xff]
        %v1028 = vld [vmem:[%s1024 + $0x18] sm:$0xff]
        %v1029 = vld [vmem:[%s1024 + $0x20] sm:$0xff]
        %v1030 = vld [vmem:[%s1024 + $0x28] sm:$0xff]
        %v1031 = vld [vmem:[%s1024 + $0x30] sm:$0xff]
        %v1032 = vld [vmem:[%s1024 + $0x38] sm:$0xff]
        %v1033 = vld [vmem:[%s1024 + $0x40] sm:$0xff]
        %v1034 = vld [vmem:[%s1024 + $0x48] sm:$0xff]
        %v1035 = vld [vmem:[%s1024 + $0x50] sm:$0xff]
        %v1036 = vld [vmem:[%s1024 + $0x58] sm:$0xff]
        %v1037 = vld [vmem:[%s1024 + $0x60] sm:$0xff]
        %v1038 = vld [vmem:[%s1024 + $0x68] sm:$0xff]
        %v1039 = vld [vmem:[%s1024 + $0x70] sm:$0xff]
        %v1040 = vld [vmem:[%s1024 + $0x78] sm:$0xff]
        %v1041 = vld [vmem:[%s1024 + $0x80] sm:$0xff]
        %v1042 = vld [vmem:[%s1024 + $0x88] sm:$0xff]
        %v1047 = vrot.slane %v1020, 2
        %v1048 = vrot.slane %v858, 2
        %v1049 = vsel %vm772, %v1047, %v1048
        %v1050 = vrot.slane %v1021, 2
        %v1051 = vrot.slane %v859, 2
        %v1052 = vsel %vm772, %v1050, %v1051
        %v1053 = vrot.slane %v1022, 2
        %v1054 = vsel %vm772, %v1048, %v1053
        %v1055 = vrot.slane %v1023, 2
        %v1056 = vsel %vm772, %v1051, %v1055
        %v1059 = vsel %vm427, %v1052, 0
        %v1061 = vsel %vm427, %v1056, 0
        %1063 = vmatpush.msra.mxu0 %v1040
        %1064 = vmatpush.msra.mxu0 %v1039
        %1065 = vmatpush.msra.mxu0 %v1038
        %1066 = vmatpush.msra.mxu0 %v1037
        %1067 = vmatpush.msra.mxu0 %v1036
        %1068 = vmatpush.msra.mxu0 %v1035
        %1069 = vmatpush.msra.mxu0 %v1034
        %1070 = vmatpush.msra.mxu0 %v1033
        %1071 = vmatpush.msra.mxu0 %v1032
        %1072 = vmatpush.msra.mxu0 %v1031
        %1073 = vmatpush.msra.mxu0 %v1030
        %1074 = vmatpush.msra.mxu0 %v1029
        %1075 = vmatpush.msra.mxu0 %v1028
        %1076 = vmatpush.msra.mxu0 %v1027
        %1077 = vmatpush.msra.mxu0 %v1026
        %1078 = vmatpush.msra.mxu0 %v1025
        %1079 = vmatmul.f32.gmra.mxu0 %v1049
        %v1080 = vpop.f32.mrf.mxu0
        %v1081 = vadd.f32 0.0, %v1080
        %1082 = vmatmul.f32.gmra.mxu0 %v1054
        %v1083 = vpop.f32.mrf.mxu0
        %v1084 = vadd.f32 0.0, %v1083
        %1085 = vdwg.mxu0
        %1086 = vmatpush.msra.mxu0 0.0
        %1087 = vmatpush.msra.mxu0 0.0
        %1088 = vmatpush.msra.mxu0 0.0
        %1089 = vmatpush.msra.mxu0 0.0
        %1090 = vmatpush.msra.mxu0 0.0
        %1091 = vmatpush.msra.mxu0 0.0
        %1092 = vmatpush.msra.mxu0 0.0
        %1093 = vmatpush.msra.mxu0 0.0
        %1094 = vmatpush.msra.mxu0 0.0
        %1095 = vmatpush.msra.mxu0 0.0
        %1096 = vmatpush.msra.mxu0 0.0
        %1097 = vmatpush.msra.mxu0 0.0
        %1098 = vmatpush.msra.mxu0 0.0
        %1099 = vmatpush.msra.mxu0 0.0
        %1100 = vmatpush.msra.mxu0 %v1042
        %1101 = vmatpush.msra.mxu0 %v1041
        %1102 = vmatmul.f32.gmra.mxu0 %v1059
        %v1103 = vpop.f32.mrf.mxu0
        %v1104 = vadd.f32 %v1081, %v1103
        %1105 = vmatmul.f32.gmra.mxu0 %v1061
        %v1106 = vpop.f32.mrf.mxu0
        %v1107 = vadd.f32 %v1084, %v1106
        %1108 = vdwg.mxu0
        %v1109 = vadd.f32 %v1015, %v1104
        %v1110 = vadd.f32 %v1018, %v1107
        %v1111 = vld [vmem:[%s6] sm:$0x1]
        %v1113 = vperm.slane %v1111, 0
        %v1115 = vadd.f32 %v1109, %v1113
        %v1116 = vadd.f32 %v1110, %v1113
        %v1117 = vmax.f32 %v1115, 0.0
        %v1118 = vmax.f32 %v1116, 0.0
        %v1121 = vrot.slane %v1117, 7
        %v1122 = vrot.slane %v1118, 7
        %v1123 = vsel %vm570, %v1121, %v1122
        %1127 = vst [vmem:[#allocation3] sm:$0xfe] %v1121
        %1128 = vst [vmem:[#allocation3 + $0x10] sm:$0xff] %v1123
        %1129 = vst [vmem:[#allocation3 + $0x20] sm:$0x1] %v1122
        %v1130 = vld [vmem:[#allocation3] sm:$0xff]
        %v1131 = vld [vmem:[#allocation3 + $0x8] sm:$0xff]
        %v1132 = vld [vmem:[#allocation3 + $0x10] sm:$0xff]
        %v1133 = vld [vmem:[#allocation3 + $0x18] sm:$0xff]
        %v1134 = vld [vmem:[#allocation12] sm:$0xff]
        %v1135 = vld [vmem:[#allocation12 + $0x8] sm:$0xff]
        %v1136 = vld [vmem:[#allocation12 + $0x10] sm:$0xff]
        %v1137 = vld [vmem:[#allocation12 + $0x18] sm:$0xff]
        %v1138 = vld [vmem:[#allocation12 + $0x20] sm:$0xff]
        %v1139 = vld [vmem:[#allocation12 + $0x28] sm:$0xff]
        %v1140 = vld [vmem:[#allocation12 + $0x30] sm:$0xff]
        %v1141 = vld [vmem:[#allocation12 + $0x38] sm:$0xff]
        %v1142 = vld [vmem:[#allocation12 + $0x40] sm:$0xff]
        %v1143 = vld [vmem:[#allocation12 + $0x48] sm:$0xff]
        %v1144 = vld [vmem:[#allocation12 + $0x50] sm:$0xff]
        %v1145 = vld [vmem:[#allocation12 + $0x58] sm:$0xff]
        %v1146 = vld [vmem:[#allocation12 + $0x60] sm:$0xff]
        %v1147 = vld [vmem:[#allocation12 + $0x68] sm:$0xff]
        %v1148 = vld [vmem:[#allocation12 + $0x70] sm:$0xff]
        %v1149 = vld [vmem:[#allocation12 + $0x78] sm:$0xff]
        %v1150 = vld [vmem:[#allocation12 + $0x80] sm:$0xff]
        %v1151 = vld [vmem:[#allocation12 + $0x88] sm:$0xff]
        %v1152 = vld [vmem:[#allocation3] sm:$0xfe]
        %v1153 = vld [vmem:[#allocation3 + $0x8] sm:$0xfe]
        %v1154 = vld [vmem:[#allocation3 + $0x20] sm:$0x1]
        %v1155 = vld [vmem:[#allocation3 + $0x28] sm:$0x1]
        %s1156 = scalar_lea.vmem [#allocation12], 144
        %v1157 = vld [vmem:[%s1156] sm:$0xff]
        %v1158 = vld [vmem:[%s1156 + $0x8] sm:$0xff]
        %v1159 = vld [vmem:[%s1156 + $0x10] sm:$0xff]
        %v1160 = vld [vmem:[%s1156 + $0x18] sm:$0xff]
        %v1161 = vld [vmem:[%s1156 + $0x20] sm:$0xff]
        %v1162 = vld [vmem:[%s1156 + $0x28] sm:$0xff]
        %v1163 = vld [vmem:[%s1156 + $0x30] sm:$0xff]
        %v1164 = vld [vmem:[%s1156 + $0x38] sm:$0xff]
        %v1165 = vld [vmem:[%s1156 + $0x40] sm:$0xff]
        %v1166 = vld [vmem:[%s1156 + $0x48] sm:$0xff]
        %v1167 = vld [vmem:[%s1156 + $0x50] sm:$0xff]
        %v1168 = vld [vmem:[%s1156 + $0x58] sm:$0xff]
        %v1169 = vld [vmem:[%s1156 + $0x60] sm:$0xff]
        %v1170 = vld [vmem:[%s1156 + $0x68] sm:$0xff]
        %v1171 = vld [vmem:[%s1156 + $0x70] sm:$0xff]
        %v1172 = vld [vmem:[%s1156 + $0x78] sm:$0xff]
        %v1173 = vld [vmem:[%s1156 + $0x80] sm:$0xff]
        %v1174 = vld [vmem:[%s1156 + $0x88] sm:$0xff]
        %v1181 = vrot.slane %v1152, 1
        %v1182 = vrot.slane %v1132, 1
        %v1183 = vsel %vm631, %v1181, %v1182
        %v1184 = vrot.slane %v1153, 1
        %v1185 = vrot.slane %v1133, 1
        %v1186 = vsel %vm631, %v1184, %v1185
        %v1187 = vrot.slane %v1154, 1
        %v1188 = vsel %vm631, %v1182, %v1187
        %v1189 = vrot.slane %v1155, 1
        %v1190 = vsel %vm631, %v1185, %v1189
        %v1193 = vsel %vm427, %v1186, 0
        %v1195 = vsel %vm427, %v1190, 0
        %1197 = vmatpush.msra.mxu0 %v1172
        %1198 = vmatpush.msra.mxu0 %v1171
        %1199 = vmatpush.msra.mxu0 %v1170
        %1200 = vmatpush.msra.mxu0 %v1169
        %1201 = vmatpush.msra.mxu0 %v1168
        %1202 = vmatpush.msra.mxu0 %v1167
        %1203 = vmatpush.msra.mxu0 %v1166
        %1204 = vmatpush.msra.mxu0 %v1165
        %1205 = vmatpush.msra.mxu0 %v1164
        %1206 = vmatpush.msra.mxu0 %v1163
        %1207 = vmatpush.msra.mxu0 %v1162
        %1208 = vmatpush.msra.mxu0 %v1161
        %1209 = vmatpush.msra.mxu0 %v1160
        %1210 = vmatpush.msra.mxu0 %v1159
        %1211 = vmatpush.msra.mxu0 %v1158
        %1212 = vmatpush.msra.mxu0 %v1157
        %1213 = vmatmul.f32.gmra.mxu0 %v1183
        %v1214 = vpop.f32.mrf.mxu0
        %v1215 = vadd.f32 0.0, %v1214
        %1216 = vmatmul.f32.gmra.mxu0 %v1188
        %v1217 = vpop.f32.mrf.mxu0
        %v1218 = vadd.f32 0.0, %v1217
        %1219 = vdwg.mxu0
        %1220 = vmatpush.msra.mxu0 0.0
        %1221 = vmatpush.msra.mxu0 0.0
        %1222 = vmatpush.msra.mxu0 0.0
        %1223 = vmatpush.msra.mxu0 0.0
        %1224 = vmatpush.msra.mxu0 0.0
        %1225 = vmatpush.msra.mxu0 0.0
        %1226 = vmatpush.msra.mxu0 0.0
        %1227 = vmatpush.msra.mxu0 0.0
        %1228 = vmatpush.msra.mxu0 0.0
        %1229 = vmatpush.msra.mxu0 0.0
        %1230 = vmatpush.msra.mxu0 0.0
        %1231 = vmatpush.msra.mxu0 0.0
        %1232 = vmatpush.msra.mxu0 0.0
        %1233 = vmatpush.msra.mxu0 0.0
        %1234 = vmatpush.msra.mxu0 %v1174
        %1235 = vmatpush.msra.mxu0 %v1173
        %1236 = vmatmul.f32.gmra.mxu0 %v1193
        %v1237 = vpop.f32.mrf.mxu0
        %v1238 = vadd.f32 %v1215, %v1237
        %1239 = vmatmul.f32.gmra.mxu0 %v1195
        %v1240 = vpop.f32.mrf.mxu0
        %v1241 = vadd.f32 %v1218, %v1240
        %1242 = vdwg.mxu0
        %v1244 = vsel %vm427, %v1131, 0
        %v1246 = vsel %vm427, %v1133, 0
        %1248 = vmatpush.msra.mxu0 %v1149
        %1249 = vmatpush.msra.mxu0 %v1148
        %1250 = vmatpush.msra.mxu0 %v1147
        %1251 = vmatpush.msra.mxu0 %v1146
        %1252 = vmatpush.msra.mxu0 %v1145
        %1253 = vmatpush.msra.mxu0 %v1144
        %1254 = vmatpush.msra.mxu0 %v1143
        %1255 = vmatpush.msra.mxu0 %v1142
        %1256 = vmatpush.msra.mxu0 %v1141
        %1257 = vmatpush.msra.mxu0 %v1140
        %1258 = vmatpush.msra.mxu0 %v1139
        %1259 = vmatpush.msra.mxu0 %v1138
        %1260 = vmatpush.msra.mxu0 %v1137
        %1261 = vmatpush.msra.mxu0 %v1136
        %1262 = vmatpush.msra.mxu0 %v1135
        %1263 = vmatpush.msra.mxu0 %v1134
        %1264 = vmatmul.f32.gmra.mxu0 %v1130
        %v1265 = vpop.f32.mrf.mxu0
        %v1266 = vadd.f32 %v1238, %v1265
        %1267 = vmatmul.f32.gmra.mxu0 %v1132
        %v1268 = vpop.f32.mrf.mxu0
        %v1269 = vadd.f32 %v1241, %v1268
        %1270 = vdwg.mxu0
        %1271 = vmatpush.msra.mxu0 0.0
        %1272 = vmatpush.msra.mxu0 0.0
        %1273 = vmatpush.msra.mxu0 0.0
        %1274 = vmatpush.msra.mxu0 0.0
        %1275 = vmatpush.msra.mxu0 0.0
        %1276 = vmatpush.msra.mxu0 0.0
        %1277 = vmatpush.msra.mxu0 0.0
        %1278 = vmatpush.msra.mxu0 0.0
        %1279 = vmatpush.msra.mxu0 0.0
        %1280 = vmatpush.msra.mxu0 0.0
        %1281 = vmatpush.msra.mxu0 0.0
        %1282 = vmatpush.msra.mxu0 0.0
        %1283 = vmatpush.msra.mxu0 0.0
        %1284 = vmatpush.msra.mxu0 0.0
        %1285 = vmatpush.msra.mxu0 %v1151
        %1286 = vmatpush.msra.mxu0 %v1150
        %1287 = vmatmul.f32.gmra.mxu0 %v1244
        %v1288 = vpop.f32.mrf.mxu0
        %v1289 = vadd.f32 %v1266, %v1288
        %1290 = vmatmul.f32.gmra.mxu0 %v1246
        %v1291 = vpop.f32.mrf.mxu0
        %v1292 = vadd.f32 %v1269, %v1291
        %1293 = vdwg.mxu0
        %v1294 = vld [vmem:[#allocation3] sm:$0xfc]
        %v1295 = vld [vmem:[#allocation3 + $0x8] sm:$0xfc]
        %v1296 = vld [vmem:[#allocation3 + $0x20] sm:$0x3]
        %v1297 = vld [vmem:[#allocation3 + $0x28] sm:$0x3]
        %s1298 = scalar_lea.vmem [#allocation12], 288
        %v1299 = vld [vmem:[%s1298] sm:$0xff]
        %v1300 = vld [vmem:[%s1298 + $0x8] sm:$0xff]
        %v1301 = vld [vmem:[%s1298 + $0x10] sm:$0xff]
        %v1302 = vld [vmem:[%s1298 + $0x18] sm:$0xff]
        %v1303 = vld [vmem:[%s1298 + $0x20] sm:$0xff]
        %v1304 = vld [vmem:[%s1298 + $0x28] sm:$0xff]
        %v1305 = vld [vmem:[%s1298 + $0x30] sm:$0xff]
        %v1306 = vld [vmem:[%s1298 + $0x38] sm:$0xff]
        %v1307 = vld [vmem:[%s1298 + $0x40] sm:$0xff]
        %v1308 = vld [vmem:[%s1298 + $0x48] sm:$0xff]
        %v1309 = vld [vmem:[%s1298 + $0x50] sm:$0xff]
        %v1310 = vld [vmem:[%s1298 + $0x58] sm:$0xff]
        %v1311 = vld [vmem:[%s1298 + $0x60] sm:$0xff]
        %v1312 = vld [vmem:[%s1298 + $0x68] sm:$0xff]
        %v1313 = vld [vmem:[%s1298 + $0x70] sm:$0xff]
        %v1314 = vld [vmem:[%s1298 + $0x78] sm:$0xff]
        %v1315 = vld [vmem:[%s1298 + $0x80] sm:$0xff]
        %v1316 = vld [vmem:[%s1298 + $0x88] sm:$0xff]
        %v1321 = vrot.slane %v1294, 2
        %v1322 = vrot.slane %v1132, 2
        %v1323 = vsel %vm772, %v1321, %v1322
        %v1324 = vrot.slane %v1295, 2
        %v1325 = vrot.slane %v1133, 2
        %v1326 = vsel %vm772, %v1324, %v1325
        %v1327 = vrot.slane %v1296, 2
        %v1328 = vsel %vm772, %v1322, %v1327
        %v1329 = vrot.slane %v1297, 2
        %v1330 = vsel %vm772, %v1325, %v1329
        %v1333 = vsel %vm427, %v1326, 0
        %v1335 = vsel %vm427, %v1330, 0
        %1337 = vmatpush.msra.mxu0 %v1314
        %1338 = vmatpush.msra.mxu0 %v1313
        %1339 = vmatpush.msra.mxu0 %v1312
        %1340 = vmatpush.msra.mxu0 %v1311
        %1341 = vmatpush.msra.mxu0 %v1310
        %1342 = vmatpush.msra.mxu0 %v1309
        %1343 = vmatpush.msra.mxu0 %v1308
        %1344 = vmatpush.msra.mxu0 %v1307
        %1345 = vmatpush.msra.mxu0 %v1306
        %1346 = vmatpush.msra.mxu0 %v1305
        %1347 = vmatpush.msra.mxu0 %v1304
        %1348 = vmatpush.msra.mxu0 %v1303
        %1349 = vmatpush.msra.mxu0 %v1302
        %1350 = vmatpush.msra.mxu0 %v1301
        %1351 = vmatpush.msra.mxu0 %v1300
        %1352 = vmatpush.msra.mxu0 %v1299
        %1353 = vmatmul.f32.gmra.mxu0 %v1323
        %v1354 = vpop.f32.mrf.mxu0
        %v1355 = vadd.f32 0.0, %v1354
        %1356 = vmatmul.f32.gmra.mxu0 %v1328
        %v1357 = vpop.f32.mrf.mxu0
        %v1358 = vadd.f32 0.0, %v1357
        %1359 = vdwg.mxu0
        %1360 = vmatpush.msra.mxu0 0.0
        %1361 = vmatpush.msra.mxu0 0.0
        %1362 = vmatpush.msra.mxu0 0.0
        %1363 = vmatpush.msra.mxu0 0.0
        %1364 = vmatpush.msra.mxu0 0.0
        %1365 = vmatpush.msra.mxu0 0.0
        %1366 = vmatpush.msra.mxu0 0.0
        %1367 = vmatpush.msra.mxu0 0.0
        %1368 = vmatpush.msra.mxu0 0.0
        %1369 = vmatpush.msra.mxu0 0.0
        %1370 = vmatpush.msra.mxu0 0.0
        %1371 = vmatpush.msra.mxu0 0.0
        %1372 = vmatpush.msra.mxu0 0.0
        %1373 = vmatpush.msra.mxu0 0.0
        %1374 = vmatpush.msra.mxu0 %v1316
        %1375 = vmatpush.msra.mxu0 %v1315
        %1376 = vmatmul.f32.gmra.mxu0 %v1333
        %v1377 = vpop.f32.mrf.mxu0
        %v1378 = vadd.f32 %v1355, %v1377
        %1379 = vmatmul.f32.gmra.mxu0 %v1335
        %v1380 = vpop.f32.mrf.mxu0
        %v1381 = vadd.f32 %v1358, %v1380
        %1382 = vdwg.mxu0
        %v1383 = vadd.f32 %v1289, %v1378
        %v1384 = vadd.f32 %v1292, %v1381
        %v1385 = vld [vmem:[%s8] sm:$0x1]
        %v1387 = vperm.slane %v1385, 0
        %v1389 = vadd.f32 %v1383, %v1387
        %v1390 = vadd.f32 %v1384, %v1387
        %v1391 = vmax.f32 %v1389, 0.0
        %v1392 = vmax.f32 %v1390, 0.0
        %1393 = vst [vmem:[%s420] sm:$0xff] %v1391
        %1394 = vst [vmem:[%s420 + $0x8] sm:$0xff] %v1392
        %p1395 = scmp.lt.s32.totalorder %s25, 1
        %s1396 = scalar_select %p1395, %s25, 1
        %s1397 = smul.addr %s1396, 2
        %s1398 = smul.addr %s1397, 8
        %s1399 = scalar_lea.vmem %s9, %s1398
        // Predicated region
        $region77: #{conv_block_forward.1} parent=55 // pred_check
          %p1400 = pneg %p237
        $region78: #{conv_block_forward.1} parent=55 // pred_check_branch
          %1402 = sbr.rel (%p1400) target = $region80
        $region79: #{conv_block_forward.1} parent=55 // pred_region
          _
        $region80: #{conv_block_forward.1} parent=55 // pred_fallthru
          _
      $region56: #{conv_block_forward.1} parent=5 // pred_fallthru
        _
      %p1403 = scmp.le.s32.totalorder 2, %s20
      // Predicated region
      $region81: #{conv_block_forward.1} parent=5 // pred_check
        %p1404 = pneg %p1403
      $region82: #{conv_block_forward.1} parent=5 // pred_check_branch
        %1406 = sbr.rel (%p1404) target = $region84
      $region83: #{conv_block_forward.1} parent=5 // pred_region
        %s1407 = ssub.s32 %s20, 2
        // Predicated region
        $region85: #{conv_block_forward.1} parent=83 // pred_check
          %p1408 = pneg %p243
        $region86: #{conv_block_forward.1} parent=83 // pred_check_branch
          %1410 = sbr.rel (%p1408) target = $region88
        $region87: #{conv_block_forward.1} parent=83 // pred_region
          %p1411 = scmp.lt.s32.totalorder %s26, 1
          %s1412 = scalar_select %p1411, %s26, 1
          %s1413 = smul.addr %s1412, 2
          %s1414 = smul.addr %s1413, 8
          %s1415 = scalar_lea.vmem %s9, %s1414
        $region88: #{conv_block_forward.1} parent=83 // pred_fallthru
          _
      $region84: #{conv_block_forward.1} parent=5 // pred_fallthru
        _
    $region6: #{conv_block_forward.1} parent=1 // loop_footer
      %s24 = sadd.s32 1, %s20
    $region7: #{conv_block_forward.1} parent=1 // loop_footer_branch
      %19 = sbr.rel target = $region3
    $region8: #{conv_block_forward.1} parent=1 // loop_exit
      _
    %1416 = vsyncpa [#allocation6], 1
    %s1417 = scalar_lea.sflag [#allocation6], 1
    %1418 = vsyncpa %s1417, 1
    %1419 = vsyncpa [#allocation8], 1
    %1420 = vsyncpa [#allocation11], 1

</llo_original>
